<compile_context>
chip_gen: v7x
topology: tpu7x:2x2x1
jax: 0.10.0
libtpu: 0.0.40
codegen_flags: <defaults>
</compile_context>

<pallas_src>
import numpy as np
import jax
import jax.numpy as jnp
from jax.experimental import pallas as pl
from jax.experimental.pallas import tpu as pltpu


def _round_up(x, m):
    return ((x + m - 1) // m) * m


def adaptive_avg_pool1d_matrix(in_len, out_len):
    """Exact nn.AdaptiveAvgPool1d as an (out_len, in_len) averaging matrix."""
    P = np.zeros((out_len, in_len), dtype=np.float32)
    for i in range(out_len):
        start = (i * in_len) // out_len
        end = -((-(i + 1) * in_len) // out_len)  # ceil((i+1)*in/out)
        P[i, start:end] = 1.0 / (end - start)
    return jnp.asarray(P)


def _build_kernel(TB, L, C, pool_mean, flat_fc1, mxu_dtype):
    C2, C8 = 2 * C, 8 * C

    def kernel(*refs):
        if flat_fc1:
            *refs, q3_buf = refs
        else:
            q3_buf = None
        if pool_mean:
            (x_ref, w1_ref, b1_ref, w2_ref, b2_ref, w3_ref, b3_ref,
             wf1_ref, bf1_ref, wf2_ref, bf2_ref, out_ref) = refs
            p1t_ref = None
        else:
            (x_ref, p1t_ref, w1_ref, b1_ref, w2_ref, b2_ref, w3_ref, b3_ref,
             wf1_ref, bf1_ref, wf2_ref, bf2_ref, out_ref) = refs

        f32 = jnp.float32

        # conv1 (k=1) + ReLU over the whole (TB*L, C) slab.
        x = x_ref[...]                                                  # (TB*L, C), mxu_dtype
        h1 = jnp.maximum(
            jnp.dot(x, w1_ref[...], preferred_element_type=f32) + b1_ref[...], 0.0)

        # AdaptiveAvgPool1d(L -> 8).
        if pool_mean:
            # L % 8 == 0: each output bin is the mean of a contiguous L//8 segment.
            q1 = jnp.mean(h1.reshape(TB * 8, L // 8, C2), axis=1)       # (TB*8, 2C)
        else:
            # Ragged L fallback: exact adaptive-pool weights (passed transposed, (L, 8)).
            h1_3d = h1.reshape(TB, L, C2)
            p1t = p1t_ref[...]                                          # (L, 8) f32
            cols = [jnp.sum(h1_3d * p1t[:, p:p + 1][None, :, :], axis=1)
                    for p in range(8)]                                  # 8 x (TB, 2C)
            q1 = jnp.stack(cols, axis=1).reshape(TB * 8, C2)

        # conv2 + ReLU.  AdaptiveAvgPool1d(8 -> 8) is the identity and is skipped.
        h2 = jnp.maximum(
            jnp.dot(q1.astype(mxu_dtype), w2_ref[...],
                    preferred_element_type=f32) + b2_ref[...], 0.0)     # (TB*8, 4C)
        # conv3 + ReLU.  Second identity pool also skipped.
        h3 = jnp.maximum(
            jnp.dot(h2.astype(mxu_dtype), w3_ref[...],
                    preferred_element_type=f32) + b3_ref[...], 0.0)     # (TB*8, 8C)

        # fc1.  PyTorch flattens (B, 8C, 8) channel-major; the fc1 weight was re-laid-out
        # in the wrapper so a position-major flatten of h3 matches it exactly.
        h3_3d = h3.reshape(TB, 8, C8)
        if flat_fc1:
            # 8C is a multiple of 128: assemble the (TB, 64C) flatten in a VMEM scratch
            # slab with dense 128-aligned stores, then ONE large-K matmul.
            for p in range(8):                                          # static unroll
                q3_buf[:, p * C8:(p + 1) * C8] = h3_3d[:, p, :]
            acc = jnp.dot(q3_buf[...].astype(mxu_dtype), wf1_ref[...],
                          preferred_element_type=f32)                   # (TB, F1)
        else:
            # Small channel count (8C < 128): a lane-merging flatten is not aligned, so
            # use 8 batched (TB, 8C) @ (8C, F1) matmuls (M=TB, independent MXU pushes).
            acc = jnp.dot(h3_3d[:, 0, :].astype(mxu_dtype), wf1_ref[0],
                          preferred_element_type=f32)
            for p in range(1, 8):                                       # static unroll
                acc = acc + jnp.dot(h3_3d[:, p, :].astype(mxu_dtype), wf1_ref[p],
                                    preferred_element_type=f32)
        fc1 = jnp.maximum(acc + bf1_ref[...], 0.0)                      # (TB, F1)

        # fc2 (output columns zero-padded to a multiple of 128 in the wrapper).
        out = jnp.dot(fc1.astype(mxu_dtype), wf2_ref[...],
                      preferred_element_type=f32) + bf2_ref[...]
        out_ref[...] = out.astype(out_ref.dtype)

    return kernel


def cnn1d_forward(x, params, *, mxu_dtype=jnp.bfloat16, block_b=None):
    """x: (B, L, C) float32 — the same tensor PyTorch's forward() receives."""
    (w1, b1, w2, b2, w3, b3, fw1, fb1, fw2, fb2) = params   # PyTorch-shaped
    B, L, C = x.shape
    F1 = fw1.shape[0]                 # input_size * 8 * 4
    out_size = fw2.shape[0]
    C8 = 8 * C

    # ---- batch blocking: amortize per-step overhead, feed the MXU M>=128 rows ----
    if block_b is None:
        TB = max(8, 512 // max(L, 1))            # target ~512 matmul rows per step
        TB = min(TB, _round_up(B, 8))            # don't over-pad tiny batches
        TB = min(_round_up(TB, 8), 512)          # multiple of 8 -> sublane-dense I/O
    else:
        TB = _round_up(max(block_b, 1), 8)
    B_pad = _round_up(B, TB)
    n_blocks = B_pad // TB

    pool_mean = (L % 8 == 0)
    flat_fc1 = (C8 % 128 == 0)

    # ---- parameter re-layout (plain JAX glue) ------------------------------------
    w1k = jnp.transpose(w1[:, :, 0]).astype(mxu_dtype)        # (C, 2C)
    w2k = jnp.transpose(w2[:, :, 0]).astype(mxu_dtype)        # (2C, 4C)
    w3k = jnp.transpose(w3[:, :, 0]).astype(mxu_dtype)        # (4C, 8C)
    b1k, b2k, b3k = b1[None, :], b2[None, :], b3[None, :]     # f32 biases
    # fc1.weight (F1, 8C*8) with flat index chan*8+pos  ->  (pos, chan, F1)
    wf1_pcf = jnp.transpose(fw1.reshape(F1, C8, 8), (2, 1, 0))
    if flat_fc1:
        wf1k = wf1_pcf.reshape(8 * C8, F1).astype(mxu_dtype)  # (64C, F1)
    else:
        wf1k = wf1_pcf.astype(mxu_dtype)                      # (8, 8C, F1)
    bf1k = fb1[None, :]
    # Pad fc2 output to a multiple of 128 lanes so the final store is unmasked/dense.
    out_pad = _round_up(out_size, 128)
    wf2k = jnp.zeros((F1, out_pad), jnp.float32).at[:, :out_size].set(jnp.transpose(fw2))
    wf2k = wf2k.astype(mxu_dtype)
    bf2k = jnp.zeros((1, out_pad), jnp.float32).at[:, :out_size].set(fb2[None, :])

    # ---- input re-layout: (B, L, C) -> zero-padded (B_pad*L, C), bf16 ------------
    x2d = x.reshape(B * L, C).astype(mxu_dtype)
    if B_pad != B:
        x2d = jnp.pad(x2d, ((0, (B_pad - B) * L), (0, 0)))

    kernel = _build_kernel(TB, L, C, pool_mean, flat_fc1, mxu_dtype)

    def full(arr):
        return pl.BlockSpec(arr.shape, lambda b, _n=arr.ndim: (0,) * _n)

    inputs = [x2d]
    in_specs = [pl.BlockSpec((TB * L, C), lambda b: (b, 0))]
    if not pool_mean:
        p1t = jnp.transpose(adaptive_avg_pool1d_matrix(L, 8))  # (L, 8), exact pool weights
        inputs.append(p1t)
        in_specs.append(full(p1t))
    weights = [w1k, b1k, w2k, b2k, w3k, b3k, wf1k, bf1k, wf2k, bf2k]
    inputs += weights
    in_specs += [full(w) for w in weights]

    scratch_shapes = [pltpu.VMEM((TB, 8 * C8), jnp.float32)] if flat_fc1 else []

    # ---- compiler params: parallel batch axis; raise scoped VMEM only if needed ---
    # TODO(synk): for very large input_size, the fc1 weight (quadratic in C) should be
    # kept in HBM (memory_space=pl.ANY) and DMA'd once / K-blocked instead of resident.
    itemsize = jnp.dtype(mxu_dtype).itemsize
    est = 2 * (TB * L * C * itemsize + TB * out_pad * 4)                       # pipelined I/O
    est += 2 * sum(int(np.prod(w.shape)) * w.dtype.itemsize for w in weights)  # weights (2-buf)
    est += TB * 8 * C8 * 4                                                     # scratch slab
    est += 4 * TB * max(L * 2 * C, 8 * C8) * 4                                 # live activations
    cp = dict(dimension_semantics=("parallel",))
    if est > 24 * 1024 * 1024:
        cp["vmem_limit_bytes"] = int(min(est * 5 // 4, 56 * 1024 * 1024))      # v7x-safe cap

    out = pl.pallas_call(
        kernel,
        out_shape=jax.ShapeDtypeStruct((B_pad, out_pad), jnp.float32),
        grid=(n_blocks,),
        in_specs=in_specs,
        out_specs=pl.BlockSpec((TB, out_pad), lambda b: (b, 0)),
        scratch_shapes=scratch_shapes,
        compiler_params=pltpu.CompilerParams(**cp),
    )(*inputs)
    return out[:B, :out_size]


def init_params(key, input_size, output_size):
    C = input_size
    ks = jax.random.split(key, 10)
    rnd = lambda k, shape, s: jax.random.normal(k, shape, jnp.float32) * s
    w1 = rnd(ks[0], (2 * C, C, 1), 0.30)
    b1 = rnd(ks[1], (2 * C,), 0.10)
    w2 = rnd(ks[2], (4 * C, 2 * C, 1), 0.20)
    b2 = rnd(ks[3], (4 * C,), 0.10)
    w3 = rnd(ks[4], (8 * C, 4 * C, 1), 0.15)
    b3 = rnd(ks[5], (8 * C,), 0.10)
    fw1 = rnd(ks[6], (C * 8 * 4, C * 8 * 8), 0.05)
    fb1 = rnd(ks[7], (C * 8 * 4,), 0.10)
    fw2 = rnd(ks[8], (output_size, C * 8 * 4), 0.05)
    fb2 = rnd(ks[9], (output_size,), 0.10)
    return (w1, b1, w2, b2, w3, b3, fw1, fb1, fw2, fb2)


def reference_forward(x, params):
    """Pure-JAX f32 mirror of the PyTorch forward (NCW conv path) for verification."""
    (w1, b1, w2, b2, w3, b3, fw1, fb1, fw2, fb2) = params
    B, L, C = x.shape
    P1 = adaptive_avg_pool1d_matrix(L, 8)
    P2 = adaptive_avg_pool1d_matrix(8, 8)
    h = jnp.transpose(x, (0, 2, 1))                                   # (B, C, L)
    h = jax.nn.relu(jnp.einsum('oc,bcl->bol', w1[:, :, 0], h) + b1[None, :, None])
    h = jnp.einsum('bol,pl->bop', h, P1)
    h = jax.nn.relu(jnp.einsum('oc,bcl->bol', w2[:, :, 0], h) + b2[None, :, None])
    h = jnp.einsum('bol,pl->bop', h, P2)
    h = jax.nn.relu(jnp.einsum('oc,bcl->bol', w3[:, :, 0], h) + b3[None, :, None])
    h = jnp.einsum('bol,pl->bop', h, P2)
    flat = h.reshape(B, -1)                                           # channel-major flatten
    f1 = jax.nn.relu(flat @ fw1.T + fb1[None, :])
    return f1 @ fw2.T + fb2[None, :]


if __name__ == "__main__":
    key = jax.random.PRNGKey(0)
    B, L, input_size, output_size = 2, 16, 4, 8
    k_x, k_p = jax.random.split(key)
    # forward() input is (batch, seq_len, features); PyTorch transposes to NCW internally.
    x = jax.random.normal(k_x, (B, L, input_size), jnp.float32)
    params = init_params(k_p, input_size, output_size)

    out = cnn1d_forward(x, params)
    out = jax.block_until_ready(out)

    ref = reference_forward(x, params)
    # bf16 MXU inputs with f32 accumulation: allow a small quantization tolerance.
    np.testing.assert_allclose(np.asarray(out), np.asarray(ref), rtol=3e-2, atol=3e-2)
    print("KERNEL_OK")
</pallas_src>

<mosaic_0001>
module attributes {stable_mosaic.version = 11 : i64} {
  func.func @kernel(%arg0: i32, %arg1: memref<128x4xbf16, #tpu.memory_space<vmem>>, %arg2: memref<4x8xbf16, #tpu.memory_space<vmem>>, %arg3: memref<1x8xf32, #tpu.memory_space<vmem>>, %arg4: memref<8x16xbf16, #tpu.memory_space<vmem>>, %arg5: memref<1x16xf32, #tpu.memory_space<vmem>>, %arg6: memref<16x32xbf16, #tpu.memory_space<vmem>>, %arg7: memref<1x32xf32, #tpu.memory_space<vmem>>, %arg8: memref<8x32x128xbf16, #tpu.memory_space<vmem>>, %arg9: memref<1x128xf32, #tpu.memory_space<vmem>>, %arg10: memref<128x128xbf16, #tpu.memory_space<vmem>>, %arg11: memref<1x128xf32, #tpu.memory_space<vmem>>, %arg12: memref<8x128xf32, #tpu.memory_space<vmem>>) attributes {dimension_semantics = [#tpu.dimension_semantics<parallel>], iteration_bounds = array<i64: 1>, scalar_prefetch = 0 : i64, scratch_operands = 0 : i64, tpu.core_type = #tpu.core_type<tc>, window_params = [{transform_indices = @transform_0, window_bounds = array<i64: 128, 4>}, {pipeline_mode = #tpu.pipeline_mode<synchronous>, transform_indices = @transform_1, window_bounds = array<i64: 4, 8>}, {pipeline_mode = #tpu.pipeline_mode<synchronous>, transform_indices = @transform_2, window_bounds = array<i64: 1, 8>}, {pipeline_mode = #tpu.pipeline_mode<synchronous>, transform_indices = @transform_3, window_bounds = array<i64: 8, 16>}, {pipeline_mode = #tpu.pipeline_mode<synchronous>, transform_indices = @transform_4, window_bounds = array<i64: 1, 16>}, {pipeline_mode = #tpu.pipeline_mode<synchronous>, transform_indices = @transform_5, window_bounds = array<i64: 16, 32>}, {pipeline_mode = #tpu.pipeline_mode<synchronous>, transform_indices = @transform_6, window_bounds = array<i64: 1, 32>}, {pipeline_mode = #tpu.pipeline_mode<synchronous>, transform_indices = @transform_7, window_bounds = array<i64: 8, 32, 128>}, {pipeline_mode = #tpu.pipeline_mode<synchronous>, transform_indices = @transform_8, window_bounds = array<i64: 1, 128>}, {pipeline_mode = #tpu.pipeline_mode<synchronous>, transform_indices = @transform_9, window_bounds = array<i64: 128, 128>}, {pipeline_mode = #tpu.pipeline_mode<synchronous>, transform_indices = @transform_10, window_bounds = array<i64: 1, 128>}, {transform_indices = @transform_11, window_bounds = array<i64: 8, 128>}]} {
    %c0 = arith.constant 0 : index
    %c0_0 = arith.constant 0 : index
    %0 = vector.load %arg1[%c0, %c0_0] : memref<128x4xbf16, #tpu.memory_space<vmem>>, vector<128x4xbf16>
    %c0_1 = arith.constant 0 : index
    %c0_2 = arith.constant 0 : index
    %1 = vector.load %arg2[%c0_1, %c0_2] : memref<4x8xbf16, #tpu.memory_space<vmem>>, vector<4x8xbf16>
    %cst = arith.constant dense<0.000000e+00> : vector<128x8xf32>
    %2 = tpu.matmul %0, %1, %cst {dimension_numbers = #tpu.dot_dimension_numbers<[1], [0], [0], [1], [0, 0, 1, 1], [], []>} : vector<128x4xbf16>, vector<4x8xbf16>, vector<128x8xf32> -> vector<128x8xf32>
    %c0_3 = arith.constant 0 : index
    %c0_4 = arith.constant 0 : index
    %3 = vector.load %arg3[%c0_3, %c0_4] : memref<1x8xf32, #tpu.memory_space<vmem>>, vector<1x8xf32>
    %4 = vector.broadcast %3 : vector<1x8xf32> to vector<128x8xf32>
    %5 = arith.addf %2, %4 : vector<128x8xf32>
    %cst_5 = arith.constant 0.000000e+00 : f32
    %6 = vector.broadcast %cst_5 : f32 to vector<128x8xf32>
    %7 = arith.maximumf %5, %6 : vector<128x8xf32>
    %8 = vector.shape_cast %7 : vector<128x8xf32> to vector<64x2x8xf32>
    %cst_6 = arith.constant dense<0.000000e+00> : vector<64x8xf32>
    %9 = vector.multi_reduction <add>, %8, %cst_6 [1] : vector<64x2x8xf32> to vector<64x8xf32>
    %cst_7 = arith.constant 2.000000e+00 : f32
    %10 = vector.broadcast %cst_7 : f32 to vector<64x8xf32>
    %11 = arith.divf %9, %10 : vector<64x8xf32>
    %12 = arith.truncf %11 : vector<64x8xf32> to vector<64x8xbf16>
    %c0_8 = arith.constant 0 : index
    %c0_9 = arith.constant 0 : index
    %13 = vector.load %arg4[%c0_8, %c0_9] : memref<8x16xbf16, #tpu.memory_space<vmem>>, vector<8x16xbf16>
    %cst_10 = arith.constant dense<0.000000e+00> : vector<64x16xf32>
    %14 = tpu.matmul %12, %13, %cst_10 {dimension_numbers = #tpu.dot_dimension_numbers<[1], [0], [0], [1], [0, 0, 1, 1], [], []>} : vector<64x8xbf16>, vector<8x16xbf16>, vector<64x16xf32> -> vector<64x16xf32>
    %c0_11 = arith.constant 0 : index
    %c0_12 = arith.constant 0 : index
    %15 = vector.load %arg5[%c0_11, %c0_12] : memref<1x16xf32, #tpu.memory_space<vmem>>, vector<1x16xf32>
    %16 = vector.broadcast %15 : vector<1x16xf32> to vector<64x16xf32>
    %17 = arith.addf %14, %16 : vector<64x16xf32>
    %cst_13 = arith.constant 0.000000e+00 : f32
    %18 = vector.broadcast %cst_13 : f32 to vector<64x16xf32>
    %19 = arith.maximumf %17, %18 : vector<64x16xf32>
    %20 = arith.truncf %19 : vector<64x16xf32> to vector<64x16xbf16>
    %c0_14 = arith.constant 0 : index
    %c0_15 = arith.constant 0 : index
    %21 = vector.load %arg6[%c0_14, %c0_15] : memref<16x32xbf16, #tpu.memory_space<vmem>>, vector<16x32xbf16>
    %cst_16 = arith.constant dense<0.000000e+00> : vector<64x32xf32>
    %22 = tpu.matmul %20, %21, %cst_16 {dimension_numbers = #tpu.dot_dimension_numbers<[1], [0], [0], [1], [0, 0, 1, 1], [], []>} : vector<64x16xbf16>, vector<16x32xbf16>, vector<64x32xf32> -> vector<64x32xf32>
    %c0_17 = arith.constant 0 : index
    %c0_18 = arith.constant 0 : index
    %23 = vector.load %arg7[%c0_17, %c0_18] : memref<1x32xf32, #tpu.memory_space<vmem>>, vector<1x32xf32>
    %24 = vector.broadcast %23 : vector<1x32xf32> to vector<64x32xf32>
    %25 = arith.addf %22, %24 : vector<64x32xf32>
    %cst_19 = arith.constant 0.000000e+00 : f32
    %26 = vector.broadcast %cst_19 : f32 to vector<64x32xf32>
    %27 = arith.maximumf %25, %26 : vector<64x32xf32>
    %28 = vector.shape_cast %27 : vector<64x32xf32> to vector<8x8x32xf32>
    %29 = vector.extract_strided_slice %28 {offsets = [0, 0, 0], sizes = [8, 1, 32], strides = [1, 1, 1]} : vector<8x8x32xf32> to vector<8x1x32xf32>
    %30 = vector.shape_cast %29 : vector<8x1x32xf32> to vector<8x32xf32>
    %31 = arith.truncf %30 : vector<8x32xf32> to vector<8x32xbf16>
    %c0_20 = arith.constant 0 : index
    %c0_21 = arith.constant 0 : index
    %c0_22 = arith.constant 0 : index
    %32 = vector.load %arg8[%c0_20, %c0_21, %c0_22] : memref<8x32x128xbf16, #tpu.memory_space<vmem>>, vector<1x32x128xbf16>
    %33 = vector.shape_cast %32 : vector<1x32x128xbf16> to vector<32x128xbf16>
    %cst_23 = arith.constant dense<0.000000e+00> : vector<8x128xf32>
    %34 = tpu.matmul %31, %33, %cst_23 {dimension_numbers = #tpu.dot_dimension_numbers<[1], [0], [0], [1], [0, 0, 1, 1], [], []>} : vector<8x32xbf16>, vector<32x128xbf16>, vector<8x128xf32> -> vector<8x128xf32>
    %35 = vector.extract_strided_slice %28 {offsets = [0, 1, 0], sizes = [8, 1, 32], strides = [1, 1, 1]} : vector<8x8x32xf32> to vector<8x1x32xf32>
    %36 = vector.shape_cast %35 : vector<8x1x32xf32> to vector<8x32xf32>
    %37 = arith.truncf %36 : vector<8x32xf32> to vector<8x32xbf16>
    %c1 = arith.constant 1 : index
    %c0_24 = arith.constant 0 : index
    %c0_25 = arith.constant 0 : index
    %38 = vector.load %arg8[%c1, %c0_24, %c0_25] : memref<8x32x128xbf16, #tpu.memory_space<vmem>>, vector<1x32x128xbf16>
    %39 = vector.shape_cast %38 : vector<1x32x128xbf16> to vector<32x128xbf16>
    %cst_26 = arith.constant dense<0.000000e+00> : vector<8x128xf32>
    %40 = tpu.matmul %37, %39, %cst_26 {dimension_numbers = #tpu.dot_dimension_numbers<[1], [0], [0], [1], [0, 0, 1, 1], [], []>} : vector<8x32xbf16>, vector<32x128xbf16>, vector<8x128xf32> -> vector<8x128xf32>
    %41 = arith.addf %34, %40 : vector<8x128xf32>
    %42 = vector.extract_strided_slice %28 {offsets = [0, 2, 0], sizes = [8, 1, 32], strides = [1, 1, 1]} : vector<8x8x32xf32> to vector<8x1x32xf32>
    %43 = vector.shape_cast %42 : vector<8x1x32xf32> to vector<8x32xf32>
    %44 = arith.truncf %43 : vector<8x32xf32> to vector<8x32xbf16>
    %c2 = arith.constant 2 : index
    %c0_27 = arith.constant 0 : index
    %c0_28 = arith.constant 0 : index
    %45 = vector.load %arg8[%c2, %c0_27, %c0_28] : memref<8x32x128xbf16, #tpu.memory_space<vmem>>, vector<1x32x128xbf16>
    %46 = vector.shape_cast %45 : vector<1x32x128xbf16> to vector<32x128xbf16>
    %cst_29 = arith.constant dense<0.000000e+00> : vector<8x128xf32>
    %47 = tpu.matmul %44, %46, %cst_29 {dimension_numbers = #tpu.dot_dimension_numbers<[1], [0], [0], [1], [0, 0, 1, 1], [], []>} : vector<8x32xbf16>, vector<32x128xbf16>, vector<8x128xf32> -> vector<8x128xf32>
    %48 = arith.addf %41, %47 : vector<8x128xf32>
    %49 = vector.extract_strided_slice %28 {offsets = [0, 3, 0], sizes = [8, 1, 32], strides = [1, 1, 1]} : vector<8x8x32xf32> to vector<8x1x32xf32>
    %50 = vector.shape_cast %49 : vector<8x1x32xf32> to vector<8x32xf32>
    %51 = arith.truncf %50 : vector<8x32xf32> to vector<8x32xbf16>
    %c3 = arith.constant 3 : index
    %c0_30 = arith.constant 0 : index
    %c0_31 = arith.constant 0 : index
    %52 = vector.load %arg8[%c3, %c0_30, %c0_31] : memref<8x32x128xbf16, #tpu.memory_space<vmem>>, vector<1x32x128xbf16>
    %53 = vector.shape_cast %52 : vector<1x32x128xbf16> to vector<32x128xbf16>
    %cst_32 = arith.constant dense<0.000000e+00> : vector<8x128xf32>
    %54 = tpu.matmul %51, %53, %cst_32 {dimension_numbers = #tpu.dot_dimension_numbers<[1], [0], [0], [1], [0, 0, 1, 1], [], []>} : vector<8x32xbf16>, vector<32x128xbf16>, vector<8x128xf32> -> vector<8x128xf32>
    %55 = arith.addf %48, %54 : vector<8x128xf32>
    %56 = vector.extract_strided_slice %28 {offsets = [0, 4, 0], sizes = [8, 1, 32], strides = [1, 1, 1]} : vector<8x8x32xf32> to vector<8x1x32xf32>
    %57 = vector.shape_cast %56 : vector<8x1x32xf32> to vector<8x32xf32>
    %58 = arith.truncf %57 : vector<8x32xf32> to vector<8x32xbf16>
    %c4 = arith.constant 4 : index
    %c0_33 = arith.constant 0 : index
    %c0_34 = arith.constant 0 : index
    %59 = vector.load %arg8[%c4, %c0_33, %c0_34] : memref<8x32x128xbf16, #tpu.memory_space<vmem>>, vector<1x32x128xbf16>
    %60 = vector.shape_cast %59 : vector<1x32x128xbf16> to vector<32x128xbf16>
    %cst_35 = arith.constant dense<0.000000e+00> : vector<8x128xf32>
    %61 = tpu.matmul %58, %60, %cst_35 {dimension_numbers = #tpu.dot_dimension_numbers<[1], [0], [0], [1], [0, 0, 1, 1], [], []>} : vector<8x32xbf16>, vector<32x128xbf16>, vector<8x128xf32> -> vector<8x128xf32>
    %62 = arith.addf %55, %61 : vector<8x128xf32>
    %63 = vector.extract_strided_slice %28 {offsets = [0, 5, 0], sizes = [8, 1, 32], strides = [1, 1, 1]} : vector<8x8x32xf32> to vector<8x1x32xf32>
    %64 = vector.shape_cast %63 : vector<8x1x32xf32> to vector<8x32xf32>
    %65 = arith.truncf %64 : vector<8x32xf32> to vector<8x32xbf16>
    %c5 = arith.constant 5 : index
    %c0_36 = arith.constant 0 : index
    %c0_37 = arith.constant 0 : index
    %66 = vector.load %arg8[%c5, %c0_36, %c0_37] : memref<8x32x128xbf16, #tpu.memory_space<vmem>>, vector<1x32x128xbf16>
    %67 = vector.shape_cast %66 : vector<1x32x128xbf16> to vector<32x128xbf16>
    %cst_38 = arith.constant dense<0.000000e+00> : vector<8x128xf32>
    %68 = tpu.matmul %65, %67, %cst_38 {dimension_numbers = #tpu.dot_dimension_numbers<[1], [0], [0], [1], [0, 0, 1, 1], [], []>} : vector<8x32xbf16>, vector<32x128xbf16>, vector<8x128xf32> -> vector<8x128xf32>
    %69 = arith.addf %62, %68 : vector<8x128xf32>
    %70 = vector.extract_strided_slice %28 {offsets = [0, 6, 0], sizes = [8, 1, 32], strides = [1, 1, 1]} : vector<8x8x32xf32> to vector<8x1x32xf32>
    %71 = vector.shape_cast %70 : vector<8x1x32xf32> to vector<8x32xf32>
    %72 = arith.truncf %71 : vector<8x32xf32> to vector<8x32xbf16>
    %c6 = arith.constant 6 : index
    %c0_39 = arith.constant 0 : index
    %c0_40 = arith.constant 0 : index
    %73 = vector.load %arg8[%c6, %c0_39, %c0_40] : memref<8x32x128xbf16, #tpu.memory_space<vmem>>, vector<1x32x128xbf16>
    %74 = vector.shape_cast %73 : vector<1x32x128xbf16> to vector<32x128xbf16>
    %cst_41 = arith.constant dense<0.000000e+00> : vector<8x128xf32>
    %75 = tpu.matmul %72, %74, %cst_41 {dimension_numbers = #tpu.dot_dimension_numbers<[1], [0], [0], [1], [0, 0, 1, 1], [], []>} : vector<8x32xbf16>, vector<32x128xbf16>, vector<8x128xf32> -> vector<8x128xf32>
    %76 = arith.addf %69, %75 : vector<8x128xf32>
    %77 = vector.extract_strided_slice %28 {offsets = [0, 7, 0], sizes = [8, 1, 32], strides = [1, 1, 1]} : vector<8x8x32xf32> to vector<8x1x32xf32>
    %78 = vector.shape_cast %77 : vector<8x1x32xf32> to vector<8x32xf32>
    %79 = arith.truncf %78 : vector<8x32xf32> to vector<8x32xbf16>
    %c7 = arith.constant 7 : index
    %c0_42 = arith.constant 0 : index
    %c0_43 = arith.constant 0 : index
    %80 = vector.load %arg8[%c7, %c0_42, %c0_43] : memref<8x32x128xbf16, #tpu.memory_space<vmem>>, vector<1x32x128xbf16>
    %81 = vector.shape_cast %80 : vector<1x32x128xbf16> to vector<32x128xbf16>
    %cst_44 = arith.constant dense<0.000000e+00> : vector<8x128xf32>
    %82 = tpu.matmul %79, %81, %cst_44 {dimension_numbers = #tpu.dot_dimension_numbers<[1], [0], [0], [1], [0, 0, 1, 1], [], []>} : vector<8x32xbf16>, vector<32x128xbf16>, vector<8x128xf32> -> vector<8x128xf32>
    %83 = arith.addf %76, %82 : vector<8x128xf32>
    %c0_45 = arith.constant 0 : index
    %c0_46 = arith.constant 0 : index
    %84 = vector.load %arg9[%c0_45, %c0_46] : memref<1x128xf32, #tpu.memory_space<vmem>>, vector<1x128xf32>
    %85 = vector.broadcast %84 : vector<1x128xf32> to vector<8x128xf32>
    %86 = arith.addf %83, %85 : vector<8x128xf32>
    %cst_47 = arith.constant 0.000000e+00 : f32
    %87 = vector.broadcast %cst_47 : f32 to vector<8x128xf32>
    %88 = arith.maximumf %86, %87 : vector<8x128xf32>
    %89 = arith.truncf %88 : vector<8x128xf32> to vector<8x128xbf16>
    %c0_48 = arith.constant 0 : index
    %c0_49 = arith.constant 0 : index
    %90 = vector.load %arg10[%c0_48, %c0_49] : memref<128x128xbf16, #tpu.memory_space<vmem>>, vector<128x128xbf16>
    %cst_50 = arith.constant dense<0.000000e+00> : vector<8x128xf32>
    %91 = tpu.matmul %89, %90, %cst_50 {dimension_numbers = #tpu.dot_dimension_numbers<[1], [0], [0], [1], [0, 0, 1, 1], [], []>} : vector<8x128xbf16>, vector<128x128xbf16>, vector<8x128xf32> -> vector<8x128xf32>
    %c0_51 = arith.constant 0 : index
    %c0_52 = arith.constant 0 : index
    %92 = vector.load %arg11[%c0_51, %c0_52] : memref<1x128xf32, #tpu.memory_space<vmem>>, vector<1x128xf32>
    %93 = vector.broadcast %92 : vector<1x128xf32> to vector<8x128xf32>
    %94 = arith.addf %91, %93 : vector<8x128xf32>
    %c0_53 = arith.constant 0 : index
    %c0_54 = arith.constant 0 : index
    %95 = vector.load %arg12[%c0_53, %c0_54] : memref<8x128xf32, #tpu.memory_space<vmem>>, vector<8x128xf32>
    tpu.vector_store %arg12[%c0_53, %c0_54], %94 {strides = array<i32>} : memref<8x128xf32, #tpu.memory_space<vmem>>, vector<8x128xf32>,
    return
  }
  func.func @transform_0(%arg0: i32) -> (i32, i32) {
    %c0_i32 = arith.constant 0 : i32
    %c0_i32_0 = arith.constant 0 : i32
    return %arg0, %c0_i32 : i32, i32
  }
  func.func @transform_1(%arg0: i32) -> (i32, i32) {
    %c0_i32 = arith.constant 0 : i32
    %c0_i32_0 = arith.constant 0 : i32
    %c0_i32_1 = arith.constant 0 : i32
    return %c0_i32, %c0_i32_0 : i32, i32
  }
  func.func @transform_2(%arg0: i32) -> (i32, i32) {
    %c0_i32 = arith.constant 0 : i32
    %c0_i32_0 = arith.constant 0 : i32
    %c0_i32_1 = arith.constant 0 : i32
    return %c0_i32, %c0_i32_0 : i32, i32
  }
  func.func @transform_3(%arg0: i32) -> (i32, i32) {
    %c0_i32 = arith.constant 0 : i32
    %c0_i32_0 = arith.constant 0 : i32
    %c0_i32_1 = arith.constant 0 : i32
    return %c0_i32, %c0_i32_0 : i32, i32
  }
  func.func @transform_4(%arg0: i32) -> (i32, i32) {
    %c0_i32 = arith.constant 0 : i32
    %c0_i32_0 = arith.constant 0 : i32
    %c0_i32_1 = arith.constant 0 : i32
    return %c0_i32, %c0_i32_0 : i32, i32
  }
  func.func @transform_5(%arg0: i32) -> (i32, i32) {
    %c0_i32 = arith.constant 0 : i32
    %c0_i32_0 = arith.constant 0 : i32
    %c0_i32_1 = arith.constant 0 : i32
    return %c0_i32, %c0_i32_0 : i32, i32
  }
  func.func @transform_6(%arg0: i32) -> (i32, i32) {
    %c0_i32 = arith.constant 0 : i32
    %c0_i32_0 = arith.constant 0 : i32
    %c0_i32_1 = arith.constant 0 : i32
    return %c0_i32, %c0_i32_0 : i32, i32
  }
  func.func @transform_7(%arg0: i32) -> (i32, i32, i32) {
    %c0_i32 = arith.constant 0 : i32
    %c0_i32_0 = arith.constant 0 : i32
    %c0_i32_1 = arith.constant 0 : i32
    %c0_i32_2 = arith.constant 0 : i32
    return %c0_i32, %c0_i32_0, %c0_i32_1 : i32, i32, i32
  }
  func.func @transform_8(%arg0: i32) -> (i32, i32) {
    %c0_i32 = arith.constant 0 : i32
    %c0_i32_0 = arith.constant 0 : i32
    %c0_i32_1 = arith.constant 0 : i32
    return %c0_i32, %c0_i32_0 : i32, i32
  }
  func.func @transform_9(%arg0: i32) -> (i32, i32) {
    %c0_i32 = arith.constant 0 : i32
    %c0_i32_0 = arith.constant 0 : i32
    %c0_i32_1 = arith.constant 0 : i32
    return %c0_i32, %c0_i32_0 : i32, i32
  }
  func.func @transform_10(%arg0: i32) -> (i32, i32) {
    %c0_i32 = arith.constant 0 : i32
    %c0_i32_0 = arith.constant 0 : i32
    %c0_i32_1 = arith.constant 0 : i32
    return %c0_i32, %c0_i32_0 : i32, i32
  }
  func.func @transform_11(%arg0: i32) -> (i32, i32) {
    %c0_i32 = arith.constant 0 : i32
    %c0_i32_0 = arith.constant 0 : i32
    return %arg0, %c0_i32 : i32, i32
  }
}

</mosaic_0001>

<llo_original>
// kernel: tpu_custom_call.1
$region0: #{tpu_custom_call.1}
  #allocation0 [shape = 'u32[]', space=smem, size = 0x4, offset = 0x4, fixed_abs, tag = 'smem constant byte address 0x4 - core index']
  #allocation1 [shape = 'u32[144,128]{1,0:T(1,128)}', space=vmem, size = 0x12000, scoped, tag = 'internal scratch']
  %s0 = inlined_call_operand.vmem [shape: bf16[128,4], index: 0, kind: input, shape index: {}]
  %s1 = inlined_call_operand.vmem [shape: bf16[4,8], index: 1, kind: input, shape index: {}]
  %s2 = inlined_call_operand.vmem [shape: f32[1,8], index: 2, kind: input, shape index: {}]
  %s3 = inlined_call_operand.vmem [shape: bf16[8,16], index: 3, kind: input, shape index: {}]
  %s4 = inlined_call_operand.vmem [shape: f32[1,16], index: 4, kind: input, shape index: {}]
  %s5 = inlined_call_operand.vmem [shape: bf16[16,32], index: 5, kind: input, shape index: {}]
  %s6 = inlined_call_operand.vmem [shape: f32[1,32], index: 6, kind: input, shape index: {}]
  %s7 = inlined_call_operand.hbm [shape: bf16[8,32,128], index: 7, kind: input, shape index: {}]
  %s8 = inlined_call_operand.vmem [shape: f32[1,128], index: 8, kind: input, shape index: {}]
  %s9 = inlined_call_operand.vmem [shape: bf16[128,128], index: 9, kind: input, shape index: {}]
  %s10 = inlined_call_operand.vmem [shape: f32[1,128], index: 10, kind: input, shape index: {}]
  %s11 = inlined_call_operand.hbm [shape: f32[8,128], index: 11, kind: output, shape index: {}]
  %s12 = sld [smem:[#allocation0]]
  $region58: #{tpu_custom_call.1} parent=0
    _
  %s14 = ssub.s32 1, %s12
  %s15 = scalar_select 0, %s14, %s12
  $region1: #{tpu_custom_call.1} parent=0
    #allocation2 [shape = 'u8[65536]{0}', space=vmem, size = 0x10000, scoped, tag = 'input window, operand 7, single buffered']
    #allocation3 [shape = 's32[1]{0}', space=sflag, size = 0x4, scoped, tag = 'scoped memory for tpu_custom_call.1']
    #allocation4 [shape = 's32[1]{0}', space=sflag, size = 0x4, scoped, tag = 'scoped memory for tpu_custom_call.1']
    #allocation5 [shape = 'u8[4096]{0}', space=vmem, size = 0x1000, scoped, tag = 'output window, operand 0, single buffered']
    %16 = vsyncpa [#allocation3], 0
    %17 = vsyncpa [#allocation4], 0
    // Predicated region
    $region2: #{tpu_custom_call.1} parent=1 // pred_check
      _
    $region3: #{tpu_custom_call.1} parent=1 // pred_check_branch
      %19 = sbr.rel (0) target = $region5
    $region4: #{tpu_custom_call.1} parent=1 // pred_region
      _
    $region5: #{tpu_custom_call.1} parent=1 // pred_fallthru
      _
    // Predicated region
    $region6: #{tpu_custom_call.1} parent=1 // pred_check
      _
    $region7: #{tpu_custom_call.1} parent=1 // pred_check_branch
      %21 = sbr.rel (0) target = $region9
    $region8: #{tpu_custom_call.1} parent=1 // pred_region
      _
    $region9: #{tpu_custom_call.1} parent=1 // pred_fallthru
      _
    // Predicated region
    $region10: #{tpu_custom_call.1} parent=1 // pred_check
      _
    $region11: #{tpu_custom_call.1} parent=1 // pred_check_branch
      %23 = sbr.rel (0) target = $region13
    $region12: #{tpu_custom_call.1} parent=1 // pred_region
      _
    $region13: #{tpu_custom_call.1} parent=1 // pred_fallthru
      _
    // Predicated region
    $region14: #{tpu_custom_call.1} parent=1 // pred_check
      _
    $region15: #{tpu_custom_call.1} parent=1 // pred_check_branch
      %25 = sbr.rel (0) target = $region17
    $region16: #{tpu_custom_call.1} parent=1 // pred_region
      _
    $region17: #{tpu_custom_call.1} parent=1 // pred_fallthru
      _
    // Predicated region
    $region18: #{tpu_custom_call.1} parent=1 // pred_check
      _
    $region19: #{tpu_custom_call.1} parent=1 // pred_check_branch
      %27 = sbr.rel (0) target = $region21
    $region20: #{tpu_custom_call.1} parent=1 // pred_region
      _
    $region21: #{tpu_custom_call.1} parent=1 // pred_fallthru
      _
    // Predicated region
    $region22: #{tpu_custom_call.1} parent=1 // pred_check
      _
    $region23: #{tpu_custom_call.1} parent=1 // pred_check_branch
      %29 = sbr.rel (0) target = $region25
    $region24: #{tpu_custom_call.1} parent=1 // pred_region
      _
    $region25: #{tpu_custom_call.1} parent=1 // pred_fallthru
      _
    // Predicated region
    $region26: #{tpu_custom_call.1} parent=1 // pred_check
      _
    $region27: #{tpu_custom_call.1} parent=1 // pred_check_branch
      %31 = sbr.rel (0) target = $region29
    $region28: #{tpu_custom_call.1} parent=1 // pred_region
      _
    $region29: #{tpu_custom_call.1} parent=1 // pred_fallthru
      _
    // Predicated region
    $region30: #{tpu_custom_call.1} parent=1 // pred_check
      _
    $region31: #{tpu_custom_call.1} parent=1 // pred_check_branch
      %33 = sbr.rel (0) target = $region33
    $region32: #{tpu_custom_call.1} parent=1 // pred_region
      %s35 = ssub.s32 2048, 2048
      %36 = vsyncadd [#allocation3], %s35
      %s37 = sshll.u32 [#allocation2], 4
      %s38 = int_to_ptr.vmem [resolvable:$true] %s37
      %43 = dma.hbm_to_vmem [thread:$0]  %s7, 2048, %s38, [#allocation3], 64, 64, 4
    $region33: #{tpu_custom_call.1} parent=1 // pred_fallthru
      _
    // Predicated region
    $region34: #{tpu_custom_call.1} parent=1 // pred_check
      _
    $region35: #{tpu_custom_call.1} parent=1 // pred_check_branch
      %45 = sbr.rel (0) target = $region37
    $region36: #{tpu_custom_call.1} parent=1 // pred_region
      _
    $region37: #{tpu_custom_call.1} parent=1 // pred_fallthru
      _
    // Predicated region
    $region38: #{tpu_custom_call.1} parent=1 // pred_check
      _
    $region39: #{tpu_custom_call.1} parent=1 // pred_check_branch
      %47 = sbr.rel (0) target = $region41
    $region40: #{tpu_custom_call.1} parent=1 // pred_region
      _
    $region41: #{tpu_custom_call.1} parent=1 // pred_fallthru
      _
    // Predicated region
    $region42: #{tpu_custom_call.1} parent=1 // pred_check
      _
    $region43: #{tpu_custom_call.1} parent=1 // pred_check_branch
      %49 = sbr.rel (0) target = $region45
    $region44: #{tpu_custom_call.1} parent=1 // pred_region
      _
    $region45: #{tpu_custom_call.1} parent=1 // pred_fallthru
      _
    // Predicated region
    $region46: #{tpu_custom_call.1} parent=1 // pred_check
      _
    $region47: #{tpu_custom_call.1} parent=1 // pred_check_branch
      %51 = sbr.rel (0) target = $region49
    $region48: #{tpu_custom_call.1} parent=1 // pred_region
      %52 = dma.done [#allocation3], 2048
    $region49: #{tpu_custom_call.1} parent=1 // pred_fallthru
      _
    %v54 = vld [vmem:[%s0] sm:$0xf]
    %v55 = vld [vmem:[%s0 + $0x4] sm:$0xf]
    %v56 = vld [vmem:[%s0 + $0x8] sm:$0xf]
    %v57 = vld [vmem:[%s0 + $0xc] sm:$0xf]
    %v58 = vld [vmem:[%s0 + $0x10] sm:$0xf]
    %v59 = vld [vmem:[%s0 + $0x14] sm:$0xf]
    %v60 = vld [vmem:[%s0 + $0x18] sm:$0xf]
    %v61 = vld [vmem:[%s0 + $0x1c] sm:$0xf]
    %v62 = vld [vmem:[%s0 + $0x20] sm:$0xf]
    %v63 = vld [vmem:[%s0 + $0x24] sm:$0xf]
    %v64 = vld [vmem:[%s0 + $0x28] sm:$0xf]
    %v65 = vld [vmem:[%s0 + $0x2c] sm:$0xf]
    %v66 = vld [vmem:[%s0 + $0x30] sm:$0xf]
    %v67 = vld [vmem:[%s0 + $0x34] sm:$0xf]
    %v68 = vld [vmem:[%s0 + $0x38] sm:$0xf]
    %v69 = vld [vmem:[%s0 + $0x3c] sm:$0xf]
    %v70 = vld [vmem:[%s1] sm:$0x3]
    %v71 = vld [vmem:[%s2] sm:$0x1]
    %v73 = vlaneseq
    %v74 = vshrl.u32 %v73, 7
    %v75 = vsub.s32 0, %v74
    %v76 = vrot.slane %v71, %v75
    %v94 = vunpack.c.l.b16 %v54
    %v95 = vunpack.c.l.b16 %v55
    %v96 = vunpack.c.l.b16 %v56
    %v97 = vunpack.c.l.b16 %v57
    %v98 = vunpack.c.l.b16 %v58
    %v99 = vunpack.c.l.b16 %v59
    %v100 = vunpack.c.l.b16 %v60
    %v101 = vunpack.c.l.b16 %v61
    %v102 = vunpack.c.l.b16 %v62
    %v103 = vunpack.c.l.b16 %v63
    %v104 = vunpack.c.l.b16 %v64
    %v105 = vunpack.c.l.b16 %v65
    %v106 = vunpack.c.l.b16 %v66
    %v107 = vunpack.c.l.b16 %v67
    %v108 = vunpack.c.l.b16 %v68
    %v109 = vunpack.c.l.b16 %v69
    %v110 = vpack.c.b16 %v95, %v94
    %v111 = vpack.c.b16 %v97, %v96
    %v112 = vpack.c.b16 %v99, %v98
    %v113 = vpack.c.b16 %v101, %v100
    %v114 = vpack.c.b16 %v103, %v102
    %v115 = vpack.c.b16 %v105, %v104
    %v116 = vpack.c.b16 %v107, %v106
    %v117 = vpack.c.b16 %v109, %v108
    %vm118 = vcmask 31744
    %v120 = vsel %vm118, %v110, 0
    %v123 = vsel %vm118, %v111, 0
    %v126 = vsel %vm118, %v112, 0
    %v129 = vsel %vm118, %v113, 0
    %v132 = vsel %vm118, %v114, 0
    %v135 = vsel %vm118, %v115, 0
    %v138 = vsel %vm118, %v116, 0
    %v141 = vsel %vm118, %v117, 0
    %vm143 = vcmask 1041408
    %v145 = vsel %vm143, %v70, 0
    %147 = vmatprep.subr.bf16.mxu0 0
    %148 = vmatpush1.bf16.msra.mxu0 %v145
    %149 = vmatprep.subr.bf16.mxu0 0
    %150 = vmatpush1.bf16.msra.mxu0 0
    %151 = vmatprep.subr.bf16.mxu0 0
    %152 = vmatpush1.bf16.msra.mxu0 0
    %153 = vmatprep.subr.bf16.mxu0 0
    %154 = vmatpush1.bf16.msra.mxu0 0
    %155 = vmatprep.subr.bf16.mxu0 0
    %156 = vmatpush1.bf16.msra.mxu0 0
    %157 = vmatprep.subr.bf16.mxu0 0
    %158 = vmatpush1.bf16.msra.mxu0 0
    %159 = vmatprep.subr.bf16.mxu0 0
    %160 = vmatpush1.bf16.msra.mxu0 0
    %161 = vmatprep.subr.bf16.mxu0 0
    %162 = vmatpush1.bf16.msra.mxu0 0
    %163 = vmatprep.subr.bf16.mxu0 0
    %164 = vmatpush1.bf16.msra.mxu0 0
    %165 = vmatprep.subr.bf16.mxu0 0
    %166 = vmatpush1.bf16.msra.mxu0 0
    %167 = vmatprep.subr.bf16.mxu0 0
    %168 = vmatpush1.bf16.msra.mxu0 0
    %169 = vmatprep.subr.bf16.mxu0 0
    %170 = vmatpush1.bf16.msra.mxu0 0
    %171 = vmatprep.subr.bf16.mxu0 0
    %172 = vmatpush1.bf16.msra.mxu0 0
    %173 = vmatprep.subr.bf16.mxu0 0
    %174 = vmatpush1.bf16.msra.mxu0 0
    %175 = vmatprep.subr.bf16.mxu0 0
    %176 = vmatpush1.bf16.msra.mxu0 0
    %177 = vmatprep.subr.bf16.mxu0 0
    %178 = vmatpush1.bf16.msra.mxu0 0
    %179 = vmatprep.mubr.bf16.mxu0 0
    %180 = vmatmul.mubr.bf16.gmra.mrb[0].mxu0 %v120
    %v181 = vpop.f32.mrb[0].mxu0
    %v182 = vadd.f32 %v76, %v181
    %v183 = vpop.f32.mrb[0].mxu0
    %v184 = vpop.f32.mrb[0].mxu0
    %v185 = vadd.f32 %v76, %v184
    %v186 = vpop.f32.mrb[0].mxu0
    %187 = vmatprep.mubr.bf16.mxu0 0
    %188 = vmatmul.mubr.bf16.gmra.mrb[0].mxu0 %v123
    %v189 = vpop.f32.mrb[0].mxu0
    %v190 = vadd.f32 %v76, %v189
    %v191 = vpop.f32.mrb[0].mxu0
    %v192 = vpop.f32.mrb[0].mxu0
    %v193 = vadd.f32 %v76, %v192
    %v194 = vpop.f32.mrb[0].mxu0
    %195 = vmatprep.mubr.bf16.mxu0 0
    %196 = vmatmul.mubr.bf16.gmra.mrb[0].mxu0 %v126
    %v197 = vpop.f32.mrb[0].mxu0
    %v198 = vadd.f32 %v76, %v197
    %v199 = vpop.f32.mrb[0].mxu0
    %v200 = vpop.f32.mrb[0].mxu0
    %v201 = vadd.f32 %v76, %v200
    %v202 = vpop.f32.mrb[0].mxu0
    %203 = vmatprep.mubr.bf16.mxu0 0
    %204 = vmatmul.mubr.bf16.gmra.mrb[0].mxu0 %v129
    %v205 = vpop.f32.mrb[0].mxu0
    %v206 = vadd.f32 %v76, %v205
    %v207 = vpop.f32.mrb[0].mxu0
    %v208 = vpop.f32.mrb[0].mxu0
    %v209 = vadd.f32 %v76, %v208
    %v210 = vpop.f32.mrb[0].mxu0
    %211 = vmatprep.mubr.bf16.mxu0 0
    %212 = vmatmul.mubr.bf16.gmra.mrb[0].mxu0 %v132
    %v213 = vpop.f32.mrb[0].mxu0
    %v214 = vadd.f32 %v76, %v213
    %v215 = vpop.f32.mrb[0].mxu0
    %v216 = vpop.f32.mrb[0].mxu0
    %v217 = vadd.f32 %v76, %v216
    %v218 = vpop.f32.mrb[0].mxu0
    %219 = vmatprep.mubr.bf16.mxu0 0
    %220 = vmatmul.mubr.bf16.gmra.mrb[0].mxu0 %v135
    %v221 = vpop.f32.mrb[0].mxu0
    %v222 = vadd.f32 %v76, %v221
    %v223 = vpop.f32.mrb[0].mxu0
    %v224 = vpop.f32.mrb[0].mxu0
    %v225 = vadd.f32 %v76, %v224
    %v226 = vpop.f32.mrb[0].mxu0
    %227 = vmatprep.mubr.bf16.mxu0 0
    %228 = vmatmul.mubr.bf16.gmra.mrb[0].mxu0 %v138
    %v229 = vpop.f32.mrb[0].mxu0
    %v230 = vadd.f32 %v76, %v229
    %v231 = vpop.f32.mrb[0].mxu0
    %v232 = vpop.f32.mrb[0].mxu0
    %v233 = vadd.f32 %v76, %v232
    %v234 = vpop.f32.mrb[0].mxu0
    %235 = vmatprep.mubr.bf16.mxu0 0
    %236 = vmatmul.mubr.bf16.gmra.mrb[0].mxu0 %v141
    %v237 = vpop.f32.mrb[0].mxu0
    %v238 = vadd.f32 %v76, %v237
    %v239 = vpop.f32.mrb[0].mxu0
    %v240 = vpop.f32.mrb[0].mxu0
    %v241 = vadd.f32 %v76, %v240
    %v242 = vpop.f32.mrb[0].mxu0
    %243 = vdwg.mxu0
    %v244 = vmax.f32 %v182, 0.0
    %v245 = vmax.f32 %v185, 0.0
    %v246 = vmax.f32 %v190, 0.0
    %v247 = vmax.f32 %v193, 0.0
    %v248 = vmax.f32 %v198, 0.0
    %v249 = vmax.f32 %v201, 0.0
    %v250 = vmax.f32 %v206, 0.0
    %v251 = vmax.f32 %v209, 0.0
    %v252 = vmax.f32 %v214, 0.0
    %v253 = vmax.f32 %v217, 0.0
    %v254 = vmax.f32 %v222, 0.0
    %v255 = vmax.f32 %v225, 0.0
    %v256 = vmax.f32 %v230, 0.0
    %v257 = vmax.f32 %v233, 0.0
    %v258 = vmax.f32 %v238, 0.0
    %v259 = vmax.f32 %v241, 0.0
    %v276 = vcombine.high %v244, %v244
    %v278 = vunpack.c.l.s4 1983009808
    %v279 = vunpack.c.0.s8 %v278
    %v280 = vlaneseq
    %v281 = vshrl.u32 %v280, 7
    %v282 = vsub.s32 %v279, %v281
    %v283 = vrot.slane %v244, %v282
    %v285 = vunpack.c.l.s4 1983009808
    %v286 = vunpack.c.0.s8 %v285
    %v287 = vlaneseq
    %v288 = vshrl.u32 %v287, 7
    %v289 = vsub.s32 %v286, %v288
    %v290 = vrot.slane %v276, %v289
    %v291 = vcombine.high %v283, %v283
    %v292 = vcombine.high %v290, %v290
    %v293 = vcombine.high %v245, %v245
    %v295 = vunpack.c.l.s4 1983009808
    %v296 = vunpack.c.0.s8 %v295
    %v297 = vlaneseq
    %v298 = vshrl.u32 %v297, 7
    %v299 = vsub.s32 %v296, %v298
    %v300 = vrot.slane %v245, %v299
    %v302 = vunpack.c.l.s4 1983009808
    %v303 = vunpack.c.0.s8 %v302
    %v304 = vlaneseq
    %v305 = vshrl.u32 %v304, 7
    %v306 = vsub.s32 %v303, %v305
    %v307 = vrot.slane %v293, %v306
    %v308 = vcombine.high %v300, %v300
    %v309 = vcombine.high %v307, %v307
    %v310 = vcombine.high %v246, %v246
    %v312 = vunpack.c.l.s4 1983009808
    %v313 = vunpack.c.0.s8 %v312
    %v314 = vlaneseq
    %v315 = vshrl.u32 %v314, 7
    %v316 = vsub.s32 %v313, %v315
    %v317 = vrot.slane %v246, %v316
    %v319 = vunpack.c.l.s4 1983009808
    %v320 = vunpack.c.0.s8 %v319
    %v321 = vlaneseq
    %v322 = vshrl.u32 %v321, 7
    %v323 = vsub.s32 %v320, %v322
    %v324 = vrot.slane %v310, %v323
    %v325 = vcombine.high %v317, %v317
    %v326 = vcombine.high %v324, %v324
    %v327 = vcombine.high %v247, %v247
    %v329 = vunpack.c.l.s4 1983009808
    %v330 = vunpack.c.0.s8 %v329
    %v331 = vlaneseq
    %v332 = vshrl.u32 %v331, 7
    %v333 = vsub.s32 %v330, %v332
    %v334 = vrot.slane %v247, %v333
    %v336 = vunpack.c.l.s4 1983009808
    %v337 = vunpack.c.0.s8 %v336
    %v338 = vlaneseq
    %v339 = vshrl.u32 %v338, 7
    %v340 = vsub.s32 %v337, %v339
    %v341 = vrot.slane %v327, %v340
    %v342 = vcombine.high %v334, %v334
    %v343 = vcombine.high %v341, %v341
    %v344 = vcombine.high %v248, %v248
    %v346 = vunpack.c.l.s4 1983009808
    %v347 = vunpack.c.0.s8 %v346
    %v348 = vlaneseq
    %v349 = vshrl.u32 %v348, 7
    %v350 = vsub.s32 %v347, %v349
    %v351 = vrot.slane %v248, %v350
    %v353 = vunpack.c.l.s4 1983009808
    %v354 = vunpack.c.0.s8 %v353
    %v355 = vlaneseq
    %v356 = vshrl.u32 %v355, 7
    %v357 = vsub.s32 %v354, %v356
    %v358 = vrot.slane %v344, %v357
    %v359 = vcombine.high %v351, %v351
    %v360 = vcombine.high %v358, %v358
    %v361 = vcombine.high %v249, %v249
    %v363 = vunpack.c.l.s4 1983009808
    %v364 = vunpack.c.0.s8 %v363
    %v365 = vlaneseq
    %v366 = vshrl.u32 %v365, 7
    %v367 = vsub.s32 %v364, %v366
    %v368 = vrot.slane %v249, %v367
    %v370 = vunpack.c.l.s4 1983009808
    %v371 = vunpack.c.0.s8 %v370
    %v372 = vlaneseq
    %v373 = vshrl.u32 %v372, 7
    %v374 = vsub.s32 %v371, %v373
    %v375 = vrot.slane %v361, %v374
    %v376 = vcombine.high %v368, %v368
    %v377 = vcombine.high %v375, %v375
    %v378 = vcombine.high %v250, %v250
    %v380 = vunpack.c.l.s4 1983009808
    %v381 = vunpack.c.0.s8 %v380
    %v382 = vlaneseq
    %v383 = vshrl.u32 %v382, 7
    %v384 = vsub.s32 %v381, %v383
    %v385 = vrot.slane %v250, %v384
    %v387 = vunpack.c.l.s4 1983009808
    %v388 = vunpack.c.0.s8 %v387
    %v389 = vlaneseq
    %v390 = vshrl.u32 %v389, 7
    %v391 = vsub.s32 %v388, %v390
    %v392 = vrot.slane %v378, %v391
    %v393 = vcombine.high %v385, %v385
    %v394 = vcombine.high %v392, %v392
    %v395 = vcombine.high %v251, %v251
    %v397 = vunpack.c.l.s4 1983009808
    %v398 = vunpack.c.0.s8 %v397
    %v399 = vlaneseq
    %v400 = vshrl.u32 %v399, 7
    %v401 = vsub.s32 %v398, %v400
    %v402 = vrot.slane %v251, %v401
    %v404 = vunpack.c.l.s4 1983009808
    %v405 = vunpack.c.0.s8 %v404
    %v406 = vlaneseq
    %v407 = vshrl.u32 %v406, 7
    %v408 = vsub.s32 %v405, %v407
    %v409 = vrot.slane %v395, %v408
    %v410 = vcombine.high %v402, %v402
    %v411 = vcombine.high %v409, %v409
    %v412 = vcombine.high %v252, %v252
    %v414 = vunpack.c.l.s4 1983009808
    %v415 = vunpack.c.0.s8 %v414
    %v416 = vlaneseq
    %v417 = vshrl.u32 %v416, 7
    %v418 = vsub.s32 %v415, %v417
    %v419 = vrot.slane %v252, %v418
    %v421 = vunpack.c.l.s4 1983009808
    %v422 = vunpack.c.0.s8 %v421
    %v423 = vlaneseq
    %v424 = vshrl.u32 %v423, 7
    %v425 = vsub.s32 %v422, %v424
    %v426 = vrot.slane %v412, %v425
    %v427 = vcombine.high %v419, %v419
    %v428 = vcombine.high %v426, %v426
    %v429 = vcombine.high %v253, %v253
    %v431 = vunpack.c.l.s4 1983009808
    %v432 = vunpack.c.0.s8 %v431
    %v433 = vlaneseq
    %v434 = vshrl.u32 %v433, 7
    %v435 = vsub.s32 %v432, %v434
    %v436 = vrot.slane %v253, %v435
    %v438 = vunpack.c.l.s4 1983009808
    %v439 = vunpack.c.0.s8 %v438
    %v440 = vlaneseq
    %v441 = vshrl.u32 %v440, 7
    %v442 = vsub.s32 %v439, %v441
    %v443 = vrot.slane %v429, %v442
    %v444 = vcombine.high %v436, %v436
    %v445 = vcombine.high %v443, %v443
    %v446 = vcombine.high %v254, %v254
    %v448 = vunpack.c.l.s4 1983009808
    %v449 = vunpack.c.0.s8 %v448
    %v450 = vlaneseq
    %v451 = vshrl.u32 %v450, 7
    %v452 = vsub.s32 %v449, %v451
    %v453 = vrot.slane %v254, %v452
    %v455 = vunpack.c.l.s4 1983009808
    %v456 = vunpack.c.0.s8 %v455
    %v457 = vlaneseq
    %v458 = vshrl.u32 %v457, 7
    %v459 = vsub.s32 %v456, %v458
    %v460 = vrot.slane %v446, %v459
    %v461 = vcombine.high %v453, %v453
    %v462 = vcombine.high %v460, %v460
    %v463 = vcombine.high %v255, %v255
    %v465 = vunpack.c.l.s4 1983009808
    %v466 = vunpack.c.0.s8 %v465
    %v467 = vlaneseq
    %v468 = vshrl.u32 %v467, 7
    %v469 = vsub.s32 %v466, %v468
    %v470 = vrot.slane %v255, %v469
    %v472 = vunpack.c.l.s4 1983009808
    %v473 = vunpack.c.0.s8 %v472
    %v474 = vlaneseq
    %v475 = vshrl.u32 %v474, 7
    %v476 = vsub.s32 %v473, %v475
    %v477 = vrot.slane %v463, %v476
    %v478 = vcombine.high %v470, %v470
    %v479 = vcombine.high %v477, %v477
    %v480 = vcombine.high %v256, %v256
    %v482 = vunpack.c.l.s4 1983009808
    %v483 = vunpack.c.0.s8 %v482
    %v484 = vlaneseq
    %v485 = vshrl.u32 %v484, 7
    %v486 = vsub.s32 %v483, %v485
    %v487 = vrot.slane %v256, %v486
    %v489 = vunpack.c.l.s4 1983009808
    %v490 = vunpack.c.0.s8 %v489
    %v491 = vlaneseq
    %v492 = vshrl.u32 %v491, 7
    %v493 = vsub.s32 %v490, %v492
    %v494 = vrot.slane %v480, %v493
    %v495 = vcombine.high %v487, %v487
    %v496 = vcombine.high %v494, %v494
    %v497 = vcombine.high %v257, %v257
    %v499 = vunpack.c.l.s4 1983009808
    %v500 = vunpack.c.0.s8 %v499
    %v501 = vlaneseq
    %v502 = vshrl.u32 %v501, 7
    %v503 = vsub.s32 %v500, %v502
    %v504 = vrot.slane %v257, %v503
    %v506 = vunpack.c.l.s4 1983009808
    %v507 = vunpack.c.0.s8 %v506
    %v508 = vlaneseq
    %v509 = vshrl.u32 %v508, 7
    %v510 = vsub.s32 %v507, %v509
    %v511 = vrot.slane %v497, %v510
    %v512 = vcombine.high %v504, %v504
    %v513 = vcombine.high %v511, %v511
    %v514 = vcombine.high %v258, %v258
    %v516 = vunpack.c.l.s4 1983009808
    %v517 = vunpack.c.0.s8 %v516
    %v518 = vlaneseq
    %v519 = vshrl.u32 %v518, 7
    %v520 = vsub.s32 %v517, %v519
    %v521 = vrot.slane %v258, %v520
    %v523 = vunpack.c.l.s4 1983009808
    %v524 = vunpack.c.0.s8 %v523
    %v525 = vlaneseq
    %v526 = vshrl.u32 %v525, 7
    %v527 = vsub.s32 %v524, %v526
    %v528 = vrot.slane %v514, %v527
    %v529 = vcombine.high %v521, %v521
    %v530 = vcombine.high %v528, %v528
    %v531 = vcombine.high %v259, %v259
    %v533 = vunpack.c.l.s4 1983009808
    %v534 = vunpack.c.0.s8 %v533
    %v535 = vlaneseq
    %v536 = vshrl.u32 %v535, 7
    %v537 = vsub.s32 %v534, %v536
    %v538 = vrot.slane %v259, %v537
    %v540 = vunpack.c.l.s4 1983009808
    %v541 = vunpack.c.0.s8 %v540
    %v542 = vlaneseq
    %v543 = vshrl.u32 %v542, 7
    %v544 = vsub.s32 %v541, %v543
    %v545 = vrot.slane %v531, %v544
    %v546 = vcombine.high %v538, %v538
    %v547 = vcombine.high %v545, %v545
    %vm612 = vcmask 58368
    %v613 = vsel %vm612, %v283, 0.0
    %v614 = vrot.slane %v613, 4
    %v615 = vadd.f32 %v613, %v614
    %v616 = vrot.slane %v615, 2
    %v617 = vadd.f32 %v615, %v616
    %v618 = vrot.slane %v617, 1
    %v619 = vadd.f32 %v617, %v618
    %v620 = vsel %vm612, %v291, 0.0
    %v621 = vrot.slane %v620, 4
    %v622 = vadd.f32 %v620, %v621
    %v623 = vrot.slane %v622, 2
    %v624 = vadd.f32 %v622, %v623
    %v625 = vrot.slane %v624, 1
    %v626 = vadd.f32 %v624, %v625
    %v627 = vsel %vm612, %v290, 0.0
    %v628 = vrot.slane %v627, 4
    %v629 = vadd.f32 %v627, %v628
    %v630 = vrot.slane %v629, 2
    %v631 = vadd.f32 %v629, %v630
    %v632 = vrot.slane %v631, 1
    %v633 = vadd.f32 %v631, %v632
    %v634 = vsel %vm612, %v292, 0.0
    %v635 = vrot.slane %v634, 4
    %v636 = vadd.f32 %v634, %v635
    %v637 = vrot.slane %v636, 2
    %v638 = vadd.f32 %v636, %v637
    %v639 = vrot.slane %v638, 1
    %v640 = vadd.f32 %v638, %v639
    %v641 = vsel %vm612, %v300, 0.0
    %v642 = vrot.slane %v641, 4
    %v643 = vadd.f32 %v641, %v642
    %v644 = vrot.slane %v643, 2
    %v645 = vadd.f32 %v643, %v644
    %v646 = vrot.slane %v645, 1
    %v647 = vadd.f32 %v645, %v646
    %v648 = vsel %vm612, %v308, 0.0
    %v649 = vrot.slane %v648, 4
    %v650 = vadd.f32 %v648, %v649
    %v651 = vrot.slane %v650, 2
    %v652 = vadd.f32 %v650, %v651
    %v653 = vrot.slane %v652, 1
    %v654 = vadd.f32 %v652, %v653
    %v655 = vsel %vm612, %v307, 0.0
    %v656 = vrot.slane %v655, 4
    %v657 = vadd.f32 %v655, %v656
    %v658 = vrot.slane %v657, 2
    %v659 = vadd.f32 %v657, %v658
    %v660 = vrot.slane %v659, 1
    %v661 = vadd.f32 %v659, %v660
    %v662 = vsel %vm612, %v309, 0.0
    %v663 = vrot.slane %v662, 4
    %v664 = vadd.f32 %v662, %v663
    %v665 = vrot.slane %v664, 2
    %v666 = vadd.f32 %v664, %v665
    %v667 = vrot.slane %v666, 1
    %v668 = vadd.f32 %v666, %v667
    %v669 = vsel %vm612, %v317, 0.0
    %v670 = vrot.slane %v669, 4
    %v671 = vadd.f32 %v669, %v670
    %v672 = vrot.slane %v671, 2
    %v673 = vadd.f32 %v671, %v672
    %v674 = vrot.slane %v673, 1
    %v675 = vadd.f32 %v673, %v674
    %v676 = vsel %vm612, %v325, 0.0
    %v677 = vrot.slane %v676, 4
    %v678 = vadd.f32 %v676, %v677
    %v679 = vrot.slane %v678, 2
    %v680 = vadd.f32 %v678, %v679
    %v681 = vrot.slane %v680, 1
    %v682 = vadd.f32 %v680, %v681
    %v683 = vsel %vm612, %v324, 0.0
    %v684 = vrot.slane %v683, 4
    %v685 = vadd.f32 %v683, %v684
    %v686 = vrot.slane %v685, 2
    %v687 = vadd.f32 %v685, %v686
    %v688 = vrot.slane %v687, 1
    %v689 = vadd.f32 %v687, %v688
    %v690 = vsel %vm612, %v326, 0.0
    %v691 = vrot.slane %v690, 4
    %v692 = vadd.f32 %v690, %v691
    %v693 = vrot.slane %v692, 2
    %v694 = vadd.f32 %v692, %v693
    %v695 = vrot.slane %v694, 1
    %v696 = vadd.f32 %v694, %v695
    %v697 = vsel %vm612, %v334, 0.0
    %v698 = vrot.slane %v697, 4
    %v699 = vadd.f32 %v697, %v698
    %v700 = vrot.slane %v699, 2
    %v701 = vadd.f32 %v699, %v700
    %v702 = vrot.slane %v701, 1
    %v703 = vadd.f32 %v701, %v702
    %v704 = vsel %vm612, %v342, 0.0
    %v705 = vrot.slane %v704, 4
    %v706 = vadd.f32 %v704, %v705
    %v707 = vrot.slane %v706, 2
    %v708 = vadd.f32 %v706, %v707
    %v709 = vrot.slane %v708, 1
    %v710 = vadd.f32 %v708, %v709
    %v711 = vsel %vm612, %v341, 0.0
    %v712 = vrot.slane %v711, 4
    %v713 = vadd.f32 %v711, %v712
    %v714 = vrot.slane %v713, 2
    %v715 = vadd.f32 %v713, %v714
    %v716 = vrot.slane %v715, 1
    %v717 = vadd.f32 %v715, %v716
    %v718 = vsel %vm612, %v343, 0.0
    %v719 = vrot.slane %v718, 4
    %v720 = vadd.f32 %v718, %v719
    %v721 = vrot.slane %v720, 2
    %v722 = vadd.f32 %v720, %v721
    %v723 = vrot.slane %v722, 1
    %v724 = vadd.f32 %v722, %v723
    %v725 = vsel %vm612, %v351, 0.0
    %v726 = vrot.slane %v725, 4
    %v727 = vadd.f32 %v725, %v726
    %v728 = vrot.slane %v727, 2
    %v729 = vadd.f32 %v727, %v728
    %v730 = vrot.slane %v729, 1
    %v731 = vadd.f32 %v729, %v730
    %v732 = vsel %vm612, %v359, 0.0
    %v733 = vrot.slane %v732, 4
    %v734 = vadd.f32 %v732, %v733
    %v735 = vrot.slane %v734, 2
    %v736 = vadd.f32 %v734, %v735
    %v737 = vrot.slane %v736, 1
    %v738 = vadd.f32 %v736, %v737
    %v739 = vsel %vm612, %v358, 0.0
    %v740 = vrot.slane %v739, 4
    %v741 = vadd.f32 %v739, %v740
    %v742 = vrot.slane %v741, 2
    %v743 = vadd.f32 %v741, %v742
    %v744 = vrot.slane %v743, 1
    %v745 = vadd.f32 %v743, %v744
    %v746 = vsel %vm612, %v360, 0.0
    %v747 = vrot.slane %v746, 4
    %v748 = vadd.f32 %v746, %v747
    %v749 = vrot.slane %v748, 2
    %v750 = vadd.f32 %v748, %v749
    %v751 = vrot.slane %v750, 1
    %v752 = vadd.f32 %v750, %v751
    %v753 = vsel %vm612, %v368, 0.0
    %v754 = vrot.slane %v753, 4
    %v755 = vadd.f32 %v753, %v754
    %v756 = vrot.slane %v755, 2
    %v757 = vadd.f32 %v755, %v756
    %v758 = vrot.slane %v757, 1
    %v759 = vadd.f32 %v757, %v758
    %v760 = vsel %vm612, %v376, 0.0
    %v761 = vrot.slane %v760, 4
    %v762 = vadd.f32 %v760, %v761
    %v763 = vrot.slane %v762, 2
    %v764 = vadd.f32 %v762, %v763
    %v765 = vrot.slane %v764, 1
    %v766 = vadd.f32 %v764, %v765
    %v767 = vsel %vm612, %v375, 0.0
    %v768 = vrot.slane %v767, 4
    %v769 = vadd.f32 %v767, %v768
    %v770 = vrot.slane %v769, 2
    %v771 = vadd.f32 %v769, %v770
    %v772 = vrot.slane %v771, 1
    %v773 = vadd.f32 %v771, %v772
    %v774 = vsel %vm612, %v377, 0.0
    %v775 = vrot.slane %v774, 4
    %v776 = vadd.f32 %v774, %v775
    %v777 = vrot.slane %v776, 2
    %v778 = vadd.f32 %v776, %v777
    %v779 = vrot.slane %v778, 1
    %v780 = vadd.f32 %v778, %v779
    %v781 = vsel %vm612, %v385, 0.0
    %v782 = vrot.slane %v781, 4
    %v783 = vadd.f32 %v781, %v782
    %v784 = vrot.slane %v783, 2
    %v785 = vadd.f32 %v783, %v784
    %v786 = vrot.slane %v785, 1
    %v787 = vadd.f32 %v785, %v786
    %v788 = vsel %vm612, %v393, 0.0
    %v789 = vrot.slane %v788, 4
    %v790 = vadd.f32 %v788, %v789
    %v791 = vrot.slane %v790, 2
    %v792 = vadd.f32 %v790, %v791
    %v793 = vrot.slane %v792, 1
    %v794 = vadd.f32 %v792, %v793
    %v795 = vsel %vm612, %v392, 0.0
    %v796 = vrot.slane %v795, 4
    %v797 = vadd.f32 %v795, %v796
    %v798 = vrot.slane %v797, 2
    %v799 = vadd.f32 %v797, %v798
    %v800 = vrot.slane %v799, 1
    %v801 = vadd.f32 %v799, %v800
    %v802 = vsel %vm612, %v394, 0.0
    %v803 = vrot.slane %v802, 4
    %v804 = vadd.f32 %v802, %v803
    %v805 = vrot.slane %v804, 2
    %v806 = vadd.f32 %v804, %v805
    %v807 = vrot.slane %v806, 1
    %v808 = vadd.f32 %v806, %v807
    %v809 = vsel %vm612, %v402, 0.0
    %v810 = vrot.slane %v809, 4
    %v811 = vadd.f32 %v809, %v810
    %v812 = vrot.slane %v811, 2
    %v813 = vadd.f32 %v811, %v812
    %v814 = vrot.slane %v813, 1
    %v815 = vadd.f32 %v813, %v814
    %v816 = vsel %vm612, %v410, 0.0
    %v817 = vrot.slane %v816, 4
    %v818 = vadd.f32 %v816, %v817
    %v819 = vrot.slane %v818, 2
    %v820 = vadd.f32 %v818, %v819
    %v821 = vrot.slane %v820, 1
    %v822 = vadd.f32 %v820, %v821
    %v823 = vsel %vm612, %v409, 0.0
    %v824 = vrot.slane %v823, 4
    %v825 = vadd.f32 %v823, %v824
    %v826 = vrot.slane %v825, 2
    %v827 = vadd.f32 %v825, %v826
    %v828 = vrot.slane %v827, 1
    %v829 = vadd.f32 %v827, %v828
    %v830 = vsel %vm612, %v411, 0.0
    %v831 = vrot.slane %v830, 4
    %v832 = vadd.f32 %v830, %v831
    %v833 = vrot.slane %v832, 2
    %v834 = vadd.f32 %v832, %v833
    %v835 = vrot.slane %v834, 1
    %v836 = vadd.f32 %v834, %v835
    %v837 = vsel %vm612, %v419, 0.0
    %v838 = vrot.slane %v837, 4
    %v839 = vadd.f32 %v837, %v838
    %v840 = vrot.slane %v839, 2
    %v841 = vadd.f32 %v839, %v840
    %v842 = vrot.slane %v841, 1
    %v843 = vadd.f32 %v841, %v842
    %v844 = vsel %vm612, %v427, 0.0
    %v845 = vrot.slane %v844, 4
    %v846 = vadd.f32 %v844, %v845
    %v847 = vrot.slane %v846, 2
    %v848 = vadd.f32 %v846, %v847
    %v849 = vrot.slane %v848, 1
    %v850 = vadd.f32 %v848, %v849
    %v851 = vsel %vm612, %v426, 0.0
    %v852 = vrot.slane %v851, 4
    %v853 = vadd.f32 %v851, %v852
    %v854 = vrot.slane %v853, 2
    %v855 = vadd.f32 %v853, %v854
    %v856 = vrot.slane %v855, 1
    %v857 = vadd.f32 %v855, %v856
    %v858 = vsel %vm612, %v428, 0.0
    %v859 = vrot.slane %v858, 4
    %v860 = vadd.f32 %v858, %v859
    %v861 = vrot.slane %v860, 2
    %v862 = vadd.f32 %v860, %v861
    %v863 = vrot.slane %v862, 1
    %v864 = vadd.f32 %v862, %v863
    %v865 = vsel %vm612, %v436, 0.0
    %v866 = vrot.slane %v865, 4
    %v867 = vadd.f32 %v865, %v866
    %v868 = vrot.slane %v867, 2
    %v869 = vadd.f32 %v867, %v868
    %v870 = vrot.slane %v869, 1
    %v871 = vadd.f32 %v869, %v870
    %v872 = vsel %vm612, %v444, 0.0
    %v873 = vrot.slane %v872, 4
    %v874 = vadd.f32 %v872, %v873
    %v875 = vrot.slane %v874, 2
    %v876 = vadd.f32 %v874, %v875
    %v877 = vrot.slane %v876, 1
    %v878 = vadd.f32 %v876, %v877
    %v879 = vsel %vm612, %v443, 0.0
    %v880 = vrot.slane %v879, 4
    %v881 = vadd.f32 %v879, %v880
    %v882 = vrot.slane %v881, 2
    %v883 = vadd.f32 %v881, %v882
    %v884 = vrot.slane %v883, 1
    %v885 = vadd.f32 %v883, %v884
    %v886 = vsel %vm612, %v445, 0.0
    %v887 = vrot.slane %v886, 4
    %v888 = vadd.f32 %v886, %v887
    %v889 = vrot.slane %v888, 2
    %v890 = vadd.f32 %v888, %v889
    %v891 = vrot.slane %v890, 1
    %v892 = vadd.f32 %v890, %v891
    %v893 = vsel %vm612, %v453, 0.0
    %v894 = vrot.slane %v893, 4
    %v895 = vadd.f32 %v893, %v894
    %v896 = vrot.slane %v895, 2
    %v897 = vadd.f32 %v895, %v896
    %v898 = vrot.slane %v897, 1
    %v899 = vadd.f32 %v897, %v898
    %v900 = vsel %vm612, %v461, 0.0
    %v901 = vrot.slane %v900, 4
    %v902 = vadd.f32 %v900, %v901
    %v903 = vrot.slane %v902, 2
    %v904 = vadd.f32 %v902, %v903
    %v905 = vrot.slane %v904, 1
    %v906 = vadd.f32 %v904, %v905
    %v907 = vsel %vm612, %v460, 0.0
    %v908 = vrot.slane %v907, 4
    %v909 = vadd.f32 %v907, %v908
    %v910 = vrot.slane %v909, 2
    %v911 = vadd.f32 %v909, %v910
    %v912 = vrot.slane %v911, 1
    %v913 = vadd.f32 %v911, %v912
    %v914 = vsel %vm612, %v462, 0.0
    %v915 = vrot.slane %v914, 4
    %v916 = vadd.f32 %v914, %v915
    %v917 = vrot.slane %v916, 2
    %v918 = vadd.f32 %v916, %v917
    %v919 = vrot.slane %v918, 1
    %v920 = vadd.f32 %v918, %v919
    %v921 = vsel %vm612, %v470, 0.0
    %v922 = vrot.slane %v921, 4
    %v923 = vadd.f32 %v921, %v922
    %v924 = vrot.slane %v923, 2
    %v925 = vadd.f32 %v923, %v924
    %v926 = vrot.slane %v925, 1
    %v927 = vadd.f32 %v925, %v926
    %v928 = vsel %vm612, %v478, 0.0
    %v929 = vrot.slane %v928, 4
    %v930 = vadd.f32 %v928, %v929
    %v931 = vrot.slane %v930, 2
    %v932 = vadd.f32 %v930, %v931
    %v933 = vrot.slane %v932, 1
    %v934 = vadd.f32 %v932, %v933
    %v935 = vsel %vm612, %v477, 0.0
    %v936 = vrot.slane %v935, 4
    %v937 = vadd.f32 %v935, %v936
    %v938 = vrot.slane %v937, 2
    %v939 = vadd.f32 %v937, %v938
    %v940 = vrot.slane %v939, 1
    %v941 = vadd.f32 %v939, %v940
    %v942 = vsel %vm612, %v479, 0.0
    %v943 = vrot.slane %v942, 4
    %v944 = vadd.f32 %v942, %v943
    %v945 = vrot.slane %v944, 2
    %v946 = vadd.f32 %v944, %v945
    %v947 = vrot.slane %v946, 1
    %v948 = vadd.f32 %v946, %v947
    %v949 = vsel %vm612, %v487, 0.0
    %v950 = vrot.slane %v949, 4
    %v951 = vadd.f32 %v949, %v950
    %v952 = vrot.slane %v951, 2
    %v953 = vadd.f32 %v951, %v952
    %v954 = vrot.slane %v953, 1
    %v955 = vadd.f32 %v953, %v954
    %v956 = vsel %vm612, %v495, 0.0
    %v957 = vrot.slane %v956, 4
    %v958 = vadd.f32 %v956, %v957
    %v959 = vrot.slane %v958, 2
    %v960 = vadd.f32 %v958, %v959
    %v961 = vrot.slane %v960, 1
    %v962 = vadd.f32 %v960, %v961
    %v963 = vsel %vm612, %v494, 0.0
    %v964 = vrot.slane %v963, 4
    %v965 = vadd.f32 %v963, %v964
    %v966 = vrot.slane %v965, 2
    %v967 = vadd.f32 %v965, %v966
    %v968 = vrot.slane %v967, 1
    %v969 = vadd.f32 %v967, %v968
    %v970 = vsel %vm612, %v496, 0.0
    %v971 = vrot.slane %v970, 4
    %v972 = vadd.f32 %v970, %v971
    %v973 = vrot.slane %v972, 2
    %v974 = vadd.f32 %v972, %v973
    %v975 = vrot.slane %v974, 1
    %v976 = vadd.f32 %v974, %v975
    %v977 = vsel %vm612, %v504, 0.0
    %v978 = vrot.slane %v977, 4
    %v979 = vadd.f32 %v977, %v978
    %v980 = vrot.slane %v979, 2
    %v981 = vadd.f32 %v979, %v980
    %v982 = vrot.slane %v981, 1
    %v983 = vadd.f32 %v981, %v982
    %v984 = vsel %vm612, %v512, 0.0
    %v985 = vrot.slane %v984, 4
    %v986 = vadd.f32 %v984, %v985
    %v987 = vrot.slane %v986, 2
    %v988 = vadd.f32 %v986, %v987
    %v989 = vrot.slane %v988, 1
    %v990 = vadd.f32 %v988, %v989
    %v991 = vsel %vm612, %v511, 0.0
    %v992 = vrot.slane %v991, 4
    %v993 = vadd.f32 %v991, %v992
    %v994 = vrot.slane %v993, 2
    %v995 = vadd.f32 %v993, %v994
    %v996 = vrot.slane %v995, 1
    %v997 = vadd.f32 %v995, %v996
    %v998 = vsel %vm612, %v513, 0.0
    %v999 = vrot.slane %v998, 4
    %v1000 = vadd.f32 %v998, %v999
    %v1001 = vrot.slane %v1000, 2
    %v1002 = vadd.f32 %v1000, %v1001
    %v1003 = vrot.slane %v1002, 1
    %v1004 = vadd.f32 %v1002, %v1003
    %v1005 = vsel %vm612, %v521, 0.0
    %v1006 = vrot.slane %v1005, 4
    %v1007 = vadd.f32 %v1005, %v1006
    %v1008 = vrot.slane %v1007, 2
    %v1009 = vadd.f32 %v1007, %v1008
    %v1010 = vrot.slane %v1009, 1
    %v1011 = vadd.f32 %v1009, %v1010
    %v1012 = vsel %vm612, %v529, 0.0
    %v1013 = vrot.slane %v1012, 4
    %v1014 = vadd.f32 %v1012, %v1013
    %v1015 = vrot.slane %v1014, 2
    %v1016 = vadd.f32 %v1014, %v1015
    %v1017 = vrot.slane %v1016, 1
    %v1018 = vadd.f32 %v1016, %v1017
    %v1019 = vsel %vm612, %v528, 0.0
    %v1020 = vrot.slane %v1019, 4
    %v1021 = vadd.f32 %v1019, %v1020
    %v1022 = vrot.slane %v1021, 2
    %v1023 = vadd.f32 %v1021, %v1022
    %v1024 = vrot.slane %v1023, 1
    %v1025 = vadd.f32 %v1023, %v1024
    %v1026 = vsel %vm612, %v530, 0.0
    %v1027 = vrot.slane %v1026, 4
    %v1028 = vadd.f32 %v1026, %v1027
    %v1029 = vrot.slane %v1028, 2
    %v1030 = vadd.f32 %v1028, %v1029
    %v1031 = vrot.slane %v1030, 1
    %v1032 = vadd.f32 %v1030, %v1031
    %v1033 = vsel %vm612, %v538, 0.0
    %v1034 = vrot.slane %v1033, 4
    %v1035 = vadd.f32 %v1033, %v1034
    %v1036 = vrot.slane %v1035, 2
    %v1037 = vadd.f32 %v1035, %v1036
    %v1038 = vrot.slane %v1037, 1
    %v1039 = vadd.f32 %v1037, %v1038
    %v1040 = vsel %vm612, %v546, 0.0
    %v1041 = vrot.slane %v1040, 4
    %v1042 = vadd.f32 %v1040, %v1041
    %v1043 = vrot.slane %v1042, 2
    %v1044 = vadd.f32 %v1042, %v1043
    %v1045 = vrot.slane %v1044, 1
    %v1046 = vadd.f32 %v1044, %v1045
    %v1047 = vsel %vm612, %v545, 0.0
    %v1048 = vrot.slane %v1047, 4
    %v1049 = vadd.f32 %v1047, %v1048
    %v1050 = vrot.slane %v1049, 2
    %v1051 = vadd.f32 %v1049, %v1050
    %v1052 = vrot.slane %v1051, 1
    %v1053 = vadd.f32 %v1051, %v1052
    %v1054 = vsel %vm612, %v547, 0.0
    %v1055 = vrot.slane %v1054, 4
    %v1056 = vadd.f32 %v1054, %v1055
    %v1057 = vrot.slane %v1056, 2
    %v1058 = vadd.f32 %v1056, %v1057
    %v1059 = vrot.slane %v1058, 1
    %v1060 = vadd.f32 %v1058, %v1059
    %v1061 = vrcp.pop 2.0
    %v1062 = vmul.f32 %v619, %v1061
    %v1063 = vmul.f32 %v626, %v1061
    %v1064 = vmul.f32 %v633, %v1061
    %v1065 = vmul.f32 %v640, %v1061
    %v1066 = vmul.f32 %v647, %v1061
    %v1067 = vmul.f32 %v654, %v1061
    %v1068 = vmul.f32 %v661, %v1061
    %v1069 = vmul.f32 %v668, %v1061
    %v1070 = vmul.f32 %v675, %v1061
    %v1071 = vmul.f32 %v682, %v1061
    %v1072 = vmul.f32 %v689, %v1061
    %v1073 = vmul.f32 %v696, %v1061
    %v1074 = vmul.f32 %v703, %v1061
    %v1075 = vmul.f32 %v710, %v1061
    %v1076 = vmul.f32 %v717, %v1061
    %v1077 = vmul.f32 %v724, %v1061
    %v1078 = vmul.f32 %v731, %v1061
    %v1079 = vmul.f32 %v738, %v1061
    %v1080 = vmul.f32 %v745, %v1061
    %v1081 = vmul.f32 %v752, %v1061
    %v1082 = vmul.f32 %v759, %v1061
    %v1083 = vmul.f32 %v766, %v1061
    %v1084 = vmul.f32 %v773, %v1061
    %v1085 = vmul.f32 %v780, %v1061
    %v1086 = vmul.f32 %v787, %v1061
    %v1087 = vmul.f32 %v794, %v1061
    %v1088 = vmul.f32 %v801, %v1061
    %v1089 = vmul.f32 %v808, %v1061
    %v1090 = vmul.f32 %v815, %v1061
    %v1091 = vmul.f32 %v822, %v1061
    %v1092 = vmul.f32 %v829, %v1061
    %v1093 = vmul.f32 %v836, %v1061
    %v1094 = vmul.f32 %v843, %v1061
    %v1095 = vmul.f32 %v850, %v1061
    %v1096 = vmul.f32 %v857, %v1061
    %v1097 = vmul.f32 %v864, %v1061
    %v1098 = vmul.f32 %v871, %v1061
    %v1099 = vmul.f32 %v878, %v1061
    %v1100 = vmul.f32 %v885, %v1061
    %v1101 = vmul.f32 %v892, %v1061
    %v1102 = vmul.f32 %v899, %v1061
    %v1103 = vmul.f32 %v906, %v1061
    %v1104 = vmul.f32 %v913, %v1061
    %v1105 = vmul.f32 %v920, %v1061
    %v1106 = vmul.f32 %v927, %v1061
    %v1107 = vmul.f32 %v934, %v1061
    %v1108 = vmul.f32 %v941, %v1061
    %v1109 = vmul.f32 %v948, %v1061
    %v1110 = vmul.f32 %v955, %v1061
    %v1111 = vmul.f32 %v962, %v1061
    %v1112 = vmul.f32 %v969, %v1061
    %v1113 = vmul.f32 %v976, %v1061
    %v1114 = vmul.f32 %v983, %v1061
    %v1115 = vmul.f32 %v990, %v1061
    %v1116 = vmul.f32 %v997, %v1061
    %v1117 = vmul.f32 %v1004, %v1061
    %v1118 = vmul.f32 %v1011, %v1061
    %v1119 = vmul.f32 %v1018, %v1061
    %v1120 = vmul.f32 %v1025, %v1061
    %v1121 = vmul.f32 %v1032, %v1061
    %v1122 = vmul.f32 %v1039, %v1061
    %v1123 = vmul.f32 %v1046, %v1061
    %v1124 = vmul.f32 %v1053, %v1061
    %v1125 = vmul.f32 %v1060, %v1061
    %v1126 = vpack.c.bf16 %v1062, %v1062
    %v1127 = vpack.c.bf16 %v1063, %v1063
    %v1128 = vpack.c.bf16 %v1064, %v1064
    %v1129 = vpack.c.bf16 %v1065, %v1065
    %v1130 = vpack.c.bf16 %v1066, %v1066
    %v1131 = vpack.c.bf16 %v1067, %v1067
    %v1132 = vpack.c.bf16 %v1068, %v1068
    %v1133 = vpack.c.bf16 %v1069, %v1069
    %v1134 = vpack.c.bf16 %v1070, %v1070
    %v1135 = vpack.c.bf16 %v1071, %v1071
    %v1136 = vpack.c.bf16 %v1072, %v1072
    %v1137 = vpack.c.bf16 %v1073, %v1073
    %v1138 = vpack.c.bf16 %v1074, %v1074
    %v1139 = vpack.c.bf16 %v1075, %v1075
    %v1140 = vpack.c.bf16 %v1076, %v1076
    %v1141 = vpack.c.bf16 %v1077, %v1077
    %v1142 = vpack.c.bf16 %v1078, %v1078
    %v1143 = vpack.c.bf16 %v1079, %v1079
    %v1144 = vpack.c.bf16 %v1080, %v1080
    %v1145 = vpack.c.bf16 %v1081, %v1081
    %v1146 = vpack.c.bf16 %v1082, %v1082
    %v1147 = vpack.c.bf16 %v1083, %v1083
    %v1148 = vpack.c.bf16 %v1084, %v1084
    %v1149 = vpack.c.bf16 %v1085, %v1085
    %v1150 = vpack.c.bf16 %v1086, %v1086
    %v1151 = vpack.c.bf16 %v1087, %v1087
    %v1152 = vpack.c.bf16 %v1088, %v1088
    %v1153 = vpack.c.bf16 %v1089, %v1089
    %v1154 = vpack.c.bf16 %v1090, %v1090
    %v1155 = vpack.c.bf16 %v1091, %v1091
    %v1156 = vpack.c.bf16 %v1092, %v1092
    %v1157 = vpack.c.bf16 %v1093, %v1093
    %v1158 = vpack.c.bf16 %v1094, %v1094
    %v1159 = vpack.c.bf16 %v1095, %v1095
    %v1160 = vpack.c.bf16 %v1096, %v1096
    %v1161 = vpack.c.bf16 %v1097, %v1097
    %v1162 = vpack.c.bf16 %v1098, %v1098
    %v1163 = vpack.c.bf16 %v1099, %v1099
    %v1164 = vpack.c.bf16 %v1100, %v1100
    %v1165 = vpack.c.bf16 %v1101, %v1101
    %v1166 = vpack.c.bf16 %v1102, %v1102
    %v1167 = vpack.c.bf16 %v1103, %v1103
    %v1168 = vpack.c.bf16 %v1104, %v1104
    %v1169 = vpack.c.bf16 %v1105, %v1105
    %v1170 = vpack.c.bf16 %v1106, %v1106
    %v1171 = vpack.c.bf16 %v1107, %v1107
    %v1172 = vpack.c.bf16 %v1108, %v1108
    %v1173 = vpack.c.bf16 %v1109, %v1109
    %v1174 = vpack.c.bf16 %v1110, %v1110
    %v1175 = vpack.c.bf16 %v1111, %v1111
    %v1176 = vpack.c.bf16 %v1112, %v1112
    %v1177 = vpack.c.bf16 %v1113, %v1113
    %v1178 = vpack.c.bf16 %v1114, %v1114
    %v1179 = vpack.c.bf16 %v1115, %v1115
    %v1180 = vpack.c.bf16 %v1116, %v1116
    %v1181 = vpack.c.bf16 %v1117, %v1117
    %v1182 = vpack.c.bf16 %v1118, %v1118
    %v1183 = vpack.c.bf16 %v1119, %v1119
    %v1184 = vpack.c.bf16 %v1120, %v1120
    %v1185 = vpack.c.bf16 %v1121, %v1121
    %v1186 = vpack.c.bf16 %v1122, %v1122
    %v1187 = vpack.c.bf16 %v1123, %v1123
    %v1188 = vpack.c.bf16 %v1124, %v1124
    %v1189 = vpack.c.bf16 %v1125, %v1125
    %v1190 = vld [vmem:[%s3] sm:$0xf]
    %v1191 = vld [vmem:[%s4] sm:$0x1]
    %v1193 = vlaneseq
    %v1194 = vshrl.u32 %v1193, 7
    %v1195 = vsub.s32 0, %v1194
    %v1196 = vrot.slane %v1191, %v1195
    %v1262 = vunpack.c.l.b16 %v1126
    %v1263 = vunpack.c.l.b16 %v1127
    %v1264 = vunpack.c.l.b16 %v1128
    %v1265 = vunpack.c.l.b16 %v1129
    %v1266 = vunpack.c.l.b16 %v1130
    %v1267 = vunpack.c.l.b16 %v1131
    %v1268 = vunpack.c.l.b16 %v1132
    %v1269 = vunpack.c.l.b16 %v1133
    %v1270 = vunpack.c.l.b16 %v1134
    %v1271 = vunpack.c.l.b16 %v1135
    %v1272 = vunpack.c.l.b16 %v1136
    %v1273 = vunpack.c.l.b16 %v1137
    %v1274 = vunpack.c.l.b16 %v1138
    %v1275 = vunpack.c.l.b16 %v1139
    %v1276 = vunpack.c.l.b16 %v1140
    %v1277 = vunpack.c.l.b16 %v1141
    %v1278 = vunpack.c.l.b16 %v1142
    %v1279 = vunpack.c.l.b16 %v1143
    %v1280 = vunpack.c.l.b16 %v1144
    %v1281 = vunpack.c.l.b16 %v1145
    %v1282 = vunpack.c.l.b16 %v1146
    %v1283 = vunpack.c.l.b16 %v1147
    %v1284 = vunpack.c.l.b16 %v1148
    %v1285 = vunpack.c.l.b16 %v1149
    %v1286 = vunpack.c.l.b16 %v1150
    %v1287 = vunpack.c.l.b16 %v1151
    %v1288 = vunpack.c.l.b16 %v1152
    %v1289 = vunpack.c.l.b16 %v1153
    %v1290 = vunpack.c.l.b16 %v1154
    %v1291 = vunpack.c.l.b16 %v1155
    %v1292 = vunpack.c.l.b16 %v1156
    %v1293 = vunpack.c.l.b16 %v1157
    %v1294 = vunpack.c.l.b16 %v1158
    %v1295 = vunpack.c.l.b16 %v1159
    %v1296 = vunpack.c.l.b16 %v1160
    %v1297 = vunpack.c.l.b16 %v1161
    %v1298 = vunpack.c.l.b16 %v1162
    %v1299 = vunpack.c.l.b16 %v1163
    %v1300 = vunpack.c.l.b16 %v1164
    %v1301 = vunpack.c.l.b16 %v1165
    %v1302 = vunpack.c.l.b16 %v1166
    %v1303 = vunpack.c.l.b16 %v1167
    %v1304 = vunpack.c.l.b16 %v1168
    %v1305 = vunpack.c.l.b16 %v1169
    %v1306 = vunpack.c.l.b16 %v1170
    %v1307 = vunpack.c.l.b16 %v1171
    %v1308 = vunpack.c.l.b16 %v1172
    %v1309 = vunpack.c.l.b16 %v1173
    %v1310 = vunpack.c.l.b16 %v1174
    %v1311 = vunpack.c.l.b16 %v1175
    %v1312 = vunpack.c.l.b16 %v1176
    %v1313 = vunpack.c.l.b16 %v1177
    %v1314 = vunpack.c.l.b16 %v1178
    %v1315 = vunpack.c.l.b16 %v1179
    %v1316 = vunpack.c.l.b16 %v1180
    %v1317 = vunpack.c.l.b16 %v1181
    %v1318 = vunpack.c.l.b16 %v1182
    %v1319 = vunpack.c.l.b16 %v1183
    %v1320 = vunpack.c.l.b16 %v1184
    %v1321 = vunpack.c.l.b16 %v1185
    %v1322 = vunpack.c.l.b16 %v1186
    %v1323 = vunpack.c.l.b16 %v1187
    %v1324 = vunpack.c.l.b16 %v1188
    %v1325 = vunpack.c.l.b16 %v1189
    %vm1326 = vcmask 1041409
    %v1327 = vsel %vm1326, %v1263, %v1262
    %vm1328 = vcmask 1042434
    %v1329 = vsel %vm1328, %v1264, %v1327
    %vm1330 = vcmask 1043459
    %v1331 = vsel %vm1330, %v1265, %v1329
    %vm1332 = vcmask 1044484
    %v1333 = vsel %vm1332, %v1266, %v1331
    %vm1334 = vcmask 1045509
    %v1335 = vsel %vm1334, %v1267, %v1333
    %vm1336 = vcmask 1046534
    %v1337 = vsel %vm1336, %v1268, %v1335
    %vm1338 = vcmask 1047559
    %v1339 = vsel %vm1338, %v1269, %v1337
    %v1340 = vsel %vm1326, %v1271, %v1270
    %v1341 = vsel %vm1328, %v1272, %v1340
    %v1342 = vsel %vm1330, %v1273, %v1341
    %v1343 = vsel %vm1332, %v1274, %v1342
    %v1344 = vsel %vm1334, %v1275, %v1343
    %v1345 = vsel %vm1336, %v1276, %v1344
    %v1346 = vsel %vm1338, %v1277, %v1345
    %v1347 = vsel %vm1326, %v1279, %v1278
    %v1348 = vsel %vm1328, %v1280, %v1347
    %v1349 = vsel %vm1330, %v1281, %v1348
    %v1350 = vsel %vm1332, %v1282, %v1349
    %v1351 = vsel %vm1334, %v1283, %v1350
    %v1352 = vsel %vm1336, %v1284, %v1351
    %v1353 = vsel %vm1338, %v1285, %v1352
    %v1354 = vsel %vm1326, %v1287, %v1286
    %v1355 = vsel %vm1328, %v1288, %v1354
    %v1356 = vsel %vm1330, %v1289, %v1355
    %v1357 = vsel %vm1332, %v1290, %v1356
    %v1358 = vsel %vm1334, %v1291, %v1357
    %v1359 = vsel %vm1336, %v1292, %v1358
    %v1360 = vsel %vm1338, %v1293, %v1359
    %v1361 = vsel %vm1326, %v1295, %v1294
    %v1362 = vsel %vm1328, %v1296, %v1361
    %v1363 = vsel %vm1330, %v1297, %v1362
    %v1364 = vsel %vm1332, %v1298, %v1363
    %v1365 = vsel %vm1334, %v1299, %v1364
    %v1366 = vsel %vm1336, %v1300, %v1365
    %v1367 = vsel %vm1338, %v1301, %v1366
    %v1368 = vsel %vm1326, %v1303, %v1302
    %v1369 = vsel %vm1328, %v1304, %v1368
    %v1370 = vsel %vm1330, %v1305, %v1369
    %v1371 = vsel %vm1332, %v1306, %v1370
    %v1372 = vsel %vm1334, %v1307, %v1371
    %v1373 = vsel %vm1336, %v1308, %v1372
    %v1374 = vsel %vm1338, %v1309, %v1373
    %v1375 = vsel %vm1326, %v1311, %v1310
    %v1376 = vsel %vm1328, %v1312, %v1375
    %v1377 = vsel %vm1330, %v1313, %v1376
    %v1378 = vsel %vm1332, %v1314, %v1377
    %v1379 = vsel %vm1334, %v1315, %v1378
    %v1380 = vsel %vm1336, %v1316, %v1379
    %v1381 = vsel %vm1338, %v1317, %v1380
    %v1382 = vsel %vm1326, %v1319, %v1318
    %v1383 = vsel %vm1328, %v1320, %v1382
    %v1384 = vsel %vm1330, %v1321, %v1383
    %v1385 = vsel %vm1332, %v1322, %v1384
    %v1386 = vsel %vm1334, %v1323, %v1385
    %v1387 = vsel %vm1336, %v1324, %v1386
    %v1388 = vsel %vm1338, %v1325, %v1387
    %v1389 = vpack.c.b16 %v1346, %v1339
    %v1390 = vpack.c.b16 %v1360, %v1353
    %v1391 = vpack.c.b16 %v1374, %v1367
    %v1392 = vpack.c.b16 %v1388, %v1381
    %vm1393 = vcmask 64512
    %v1395 = vsel %vm1393, %v1389, 0
    %v1398 = vsel %vm1393, %v1390, 0
    %v1401 = vsel %vm1393, %v1391, 0
    %v1404 = vsel %vm1393, %v1392, 0
    %vm1406 = vcmask 1043456
    %v1408 = vsel %vm1406, %v1190, 0
    %1410 = vmatprep.subr.bf16.mxu0 0
    %1411 = vmatpush1.bf16.msra.mxu0 %v1408
    %1412 = vmatprep.subr.bf16.mxu0 0
    %1413 = vmatpush1.bf16.msra.mxu0 0
    %1414 = vmatprep.subr.bf16.mxu0 0
    %1415 = vmatpush1.bf16.msra.mxu0 0
    %1416 = vmatprep.subr.bf16.mxu0 0
    %1417 = vmatpush1.bf16.msra.mxu0 0
    %1418 = vmatprep.subr.bf16.mxu0 0
    %1419 = vmatpush1.bf16.msra.mxu0 0
    %1420 = vmatprep.subr.bf16.mxu0 0
    %1421 = vmatpush1.bf16.msra.mxu0 0
    %1422 = vmatprep.subr.bf16.mxu0 0
    %1423 = vmatpush1.bf16.msra.mxu0 0
    %1424 = vmatprep.subr.bf16.mxu0 0
    %1425 = vmatpush1.bf16.msra.mxu0 0
    %1426 = vmatprep.subr.bf16.mxu0 0
    %1427 = vmatpush1.bf16.msra.mxu0 0
    %1428 = vmatprep.subr.bf16.mxu0 0
    %1429 = vmatpush1.bf16.msra.mxu0 0
    %1430 = vmatprep.subr.bf16.mxu0 0
    %1431 = vmatpush1.bf16.msra.mxu0 0
    %1432 = vmatprep.subr.bf16.mxu0 0
    %1433 = vmatpush1.bf16.msra.mxu0 0
    %1434 = vmatprep.subr.bf16.mxu0 0
    %1435 = vmatpush1.bf16.msra.mxu0 0
    %1436 = vmatprep.subr.bf16.mxu0 0
    %1437 = vmatpush1.bf16.msra.mxu0 0
    %1438 = vmatprep.subr.bf16.mxu0 0
    %1439 = vmatpush1.bf16.msra.mxu0 0
    %1440 = vmatprep.subr.bf16.mxu0 0
    %1441 = vmatpush1.bf16.msra.mxu0 0
    %1442 = vmatprep.mubr.bf16.mxu0 0
    %1443 = vmatmul.mubr.bf16.gmra.mrb[0].mxu0 %v1395
    %v1444 = vpop.f32.mrb[0].mxu0
    %v1445 = vadd.f32 %v1196, %v1444
    %v1446 = vpop.f32.mrb[0].mxu0
    %v1447 = vpop.f32.mrb[0].mxu0
    %v1448 = vadd.f32 %v1196, %v1447
    %v1449 = vpop.f32.mrb[0].mxu0
    %1450 = vmatprep.mubr.bf16.mxu0 0
    %1451 = vmatmul.mubr.bf16.gmra.mrb[0].mxu0 %v1398
    %v1452 = vpop.f32.mrb[0].mxu0
    %v1453 = vadd.f32 %v1196, %v1452
    %v1454 = vpop.f32.mrb[0].mxu0
    %v1455 = vpop.f32.mrb[0].mxu0
    %v1456 = vadd.f32 %v1196, %v1455
    %v1457 = vpop.f32.mrb[0].mxu0
    %1458 = vmatprep.mubr.bf16.mxu0 0
    %1459 = vmatmul.mubr.bf16.gmra.mrb[0].mxu0 %v1401
    %v1460 = vpop.f32.mrb[0].mxu0
    %v1461 = vadd.f32 %v1196, %v1460
    %v1462 = vpop.f32.mrb[0].mxu0
    %v1463 = vpop.f32.mrb[0].mxu0
    %v1464 = vadd.f32 %v1196, %v1463
    %v1465 = vpop.f32.mrb[0].mxu0
    %1466 = vmatprep.mubr.bf16.mxu0 0
    %1467 = vmatmul.mubr.bf16.gmra.mrb[0].mxu0 %v1404
    %v1468 = vpop.f32.mrb[0].mxu0
    %v1469 = vadd.f32 %v1196, %v1468
    %v1470 = vpop.f32.mrb[0].mxu0
    %v1471 = vpop.f32.mrb[0].mxu0
    %v1472 = vadd.f32 %v1196, %v1471
    %v1473 = vpop.f32.mrb[0].mxu0
    %1474 = vdwg.mxu0
    %v1475 = vmax.f32 %v1445, 0.0
    %v1476 = vmax.f32 %v1448, 0.0
    %v1477 = vmax.f32 %v1453, 0.0
    %v1478 = vmax.f32 %v1456, 0.0
    %v1479 = vmax.f32 %v1461, 0.0
    %v1480 = vmax.f32 %v1464, 0.0
    %v1481 = vmax.f32 %v1469, 0.0
    %v1482 = vmax.f32 %v1472, 0.0
    %v1483 = vpack.c.bf16 %v1476, %v1475
    %v1484 = vpack.c.bf16 %v1478, %v1477
    %v1485 = vpack.c.bf16 %v1480, %v1479
    %v1486 = vpack.c.bf16 %v1482, %v1481
    %v1487 = vld [vmem:[%s5] sm:$0xf]
    %v1488 = vld [vmem:[%s5 + $0x4] sm:$0xf]
    %v1489 = vld [vmem:[%s6] sm:$0x1]
    %v1491 = vlaneseq
    %v1492 = vshrl.u32 %v1491, 7
    %v1493 = vsub.s32 0, %v1492
    %v1494 = vrot.slane %v1489, %v1493
    %v1498 = vunpack.c.l.b16 %v1487
    %v1499 = vunpack.c.l.b16 %v1488
    %v1500 = vpack.c.b16 %v1499, %v1498
    %vm1502 = vcmask 130048
    %v1504 = vsel %vm1502, %v1483, 0
    %v1507 = vsel %vm1502, %v1484, 0
    %v1510 = vsel %vm1502, %v1485, 0
    %v1513 = vsel %vm1502, %v1486, 0
    %1515 = vmatprep.subr.bf16.mxu0 0
    %1516 = vmatpush1.bf16.msra.mxu0 %v1500
    %1517 = vmatprep.subr.bf16.mxu0 0
    %1518 = vmatpush1.bf16.msra.mxu0 0
    %1519 = vmatprep.subr.bf16.mxu0 0
    %1520 = vmatpush1.bf16.msra.mxu0 0
    %1521 = vmatprep.subr.bf16.mxu0 0
    %1522 = vmatpush1.bf16.msra.mxu0 0
    %1523 = vmatprep.subr.bf16.mxu0 0
    %1524 = vmatpush1.bf16.msra.mxu0 0
    %1525 = vmatprep.subr.bf16.mxu0 0
    %1526 = vmatpush1.bf16.msra.mxu0 0
    %1527 = vmatprep.subr.bf16.mxu0 0
    %1528 = vmatpush1.bf16.msra.mxu0 0
    %1529 = vmatprep.subr.bf16.mxu0 0
    %1530 = vmatpush1.bf16.msra.mxu0 0
    %1531 = vmatprep.subr.bf16.mxu0 0
    %1532 = vmatpush1.bf16.msra.mxu0 0
    %1533 = vmatprep.subr.bf16.mxu0 0
    %1534 = vmatpush1.bf16.msra.mxu0 0
    %1535 = vmatprep.subr.bf16.mxu0 0
    %1536 = vmatpush1.bf16.msra.mxu0 0
    %1537 = vmatprep.subr.bf16.mxu0 0
    %1538 = vmatpush1.bf16.msra.mxu0 0
    %1539 = vmatprep.subr.bf16.mxu0 0
    %1540 = vmatpush1.bf16.msra.mxu0 0
    %1541 = vmatprep.subr.bf16.mxu0 0
    %1542 = vmatpush1.bf16.msra.mxu0 0
    %1543 = vmatprep.subr.bf16.mxu0 0
    %1544 = vmatpush1.bf16.msra.mxu0 0
    %1545 = vmatprep.subr.bf16.mxu0 0
    %1546 = vmatpush1.bf16.msra.mxu0 0
    %1547 = vmatprep.mubr.bf16.mxu0 0
    %1548 = vmatmul.mubr.bf16.gmra.mrb[0].mxu0 %v1504
    %v1549 = vpop.f32.mrb[0].mxu0
    %v1550 = vadd.f32 %v1494, %v1549
    %v1551 = vpop.f32.mrb[0].mxu0
    %v1552 = vpop.f32.mrb[0].mxu0
    %v1553 = vadd.f32 %v1494, %v1552
    %v1554 = vpop.f32.mrb[0].mxu0
    %1555 = vmatprep.mubr.bf16.mxu0 0
    %1556 = vmatmul.mubr.bf16.gmra.mrb[0].mxu0 %v1507
    %v1557 = vpop.f32.mrb[0].mxu0
    %v1558 = vadd.f32 %v1494, %v1557
    %v1559 = vpop.f32.mrb[0].mxu0
    %v1560 = vpop.f32.mrb[0].mxu0
    %v1561 = vadd.f32 %v1494, %v1560
    %v1562 = vpop.f32.mrb[0].mxu0
    %1563 = vmatprep.mubr.bf16.mxu0 0
    %1564 = vmatmul.mubr.bf16.gmra.mrb[0].mxu0 %v1510
    %v1565 = vpop.f32.mrb[0].mxu0
    %v1566 = vadd.f32 %v1494, %v1565
    %v1567 = vpop.f32.mrb[0].mxu0
    %v1568 = vpop.f32.mrb[0].mxu0
    %v1569 = vadd.f32 %v1494, %v1568
    %v1570 = vpop.f32.mrb[0].mxu0
    %1571 = vmatprep.mubr.bf16.mxu0 0
    %1572 = vmatmul.mubr.bf16.gmra.mrb[0].mxu0 %v1513
    %v1573 = vpop.f32.mrb[0].mxu0
    %v1574 = vadd.f32 %v1494, %v1573
    %v1575 = vpop.f32.mrb[0].mxu0
    %v1576 = vpop.f32.mrb[0].mxu0
    %v1577 = vadd.f32 %v1494, %v1576
    %v1578 = vpop.f32.mrb[0].mxu0
    %1579 = vdwg.mxu0
    %v1580 = vmax.f32 %v1550, 0.0
    %v1581 = vmax.f32 %v1553, 0.0
    %v1582 = vmax.f32 %v1558, 0.0
    %v1583 = vmax.f32 %v1561, 0.0
    %v1584 = vmax.f32 %v1566, 0.0
    %v1585 = vmax.f32 %v1569, 0.0
    %v1586 = vmax.f32 %v1574, 0.0
    %v1587 = vmax.f32 %v1577, 0.0
    %v1588 = vpack.c.bf16 %v1580, %v1580
    %v1589 = vpack.c.bf16 %v1581, %v1581
    %v1590 = vpack.c.bf16 %v1582, %v1582
    %v1591 = vpack.c.bf16 %v1583, %v1583
    %v1592 = vpack.c.bf16 %v1584, %v1584
    %v1593 = vpack.c.bf16 %v1585, %v1585
    %v1594 = vpack.c.bf16 %v1586, %v1586
    %v1595 = vpack.c.bf16 %v1587, %v1587
    %v1596 = vld [vmem:[#allocation2] sm:$0xf]
    %v1597 = vld [vmem:[#allocation2 + $0x4] sm:$0xf]
    %v1598 = vld [vmem:[#allocation2 + $0x8] sm:$0xf]
    %v1599 = vld [vmem:[#allocation2 + $0xc] sm:$0xf]
    %s1600 = scalar_lea.vmem [#allocation2], 16
    %v1601 = vld [vmem:[%s1600] sm:$0xf]
    %v1602 = vld [vmem:[%s1600 + $0x4] sm:$0xf]
    %v1603 = vld [vmem:[%s1600 + $0x8] sm:$0xf]
    %v1604 = vld [vmem:[%s1600 + $0xc] sm:$0xf]
    %v1613 = vunpack.c.l.b16 %v1588
    %v1614 = vunpack.c.l.b16 %v1589
    %v1615 = vunpack.c.l.b16 %v1590
    %v1616 = vunpack.c.l.b16 %v1591
    %v1617 = vunpack.c.l.b16 %v1592
    %v1618 = vunpack.c.l.b16 %v1593
    %v1619 = vunpack.c.l.b16 %v1594
    %v1620 = vunpack.c.l.b16 %v1595
    %v1621 = vrot.slane %v1613, 1
    %v1622 = vsel %vm1326, %v1614, %v1621
    %v1623 = vrot.slane %v1615, 7
    %v1624 = vsel %vm1328, %v1623, %v1622
    %v1625 = vrot.slane %v1616, 6
    %v1626 = vsel %vm1330, %v1625, %v1624
    %v1627 = vrot.slane %v1617, 5
    %v1628 = vsel %vm1332, %v1627, %v1626
    %v1629 = vrot.slane %v1618, 4
    %v1630 = vsel %vm1334, %v1629, %v1628
    %v1631 = vrot.slane %v1619, 3
    %v1632 = vsel %vm1336, %v1631, %v1630
    %v1633 = vrot.slane %v1620, 2
    %v1634 = vsel %vm1338, %v1633, %v1632
    %v1635 = vpack.c.b16 %v1634, %v1634
    %v1640 = vunpack.c.l.b16 %v1601
    %v1641 = vunpack.c.l.b16 %v1602
    %v1642 = vunpack.c.l.b16 %v1603
    %v1643 = vunpack.c.l.b16 %v1604
    %v1644 = vpack.c.b16 %v1641, %v1640
    %v1645 = vpack.c.b16 %v1643, %v1642
    %vm1648 = vcmask 261120
    %v1650 = vsel %vm1648, %v1635, 0
    %1652 = vmatprep.subr.bf16.mxu0 0
    %1653 = vmatpush1.bf16.msra.mxu0 %v1644
    %1654 = vmatprep.subr.bf16.mxu0 0
    %1655 = vmatpush1.bf16.msra.mxu0 %v1645
    %1656 = vmatprep.subr.bf16.mxu0 0
    %1657 = vmatpush1.bf16.msra.mxu0 0
    %1658 = vmatprep.subr.bf16.mxu0 0
    %1659 = vmatpush1.bf16.msra.mxu0 0
    %1660 = vmatprep.subr.bf16.mxu0 0
    %1661 = vmatpush1.bf16.msra.mxu0 0
    %1662 = vmatprep.subr.bf16.mxu0 0
    %1663 = vmatpush1.bf16.msra.mxu0 0
    %1664 = vmatprep.subr.bf16.mxu0 0
    %1665 = vmatpush1.bf16.msra.mxu0 0
    %1666 = vmatprep.subr.bf16.mxu0 0
    %1667 = vmatpush1.bf16.msra.mxu0 0
    %1668 = vmatprep.subr.bf16.mxu0 0
    %1669 = vmatpush1.bf16.msra.mxu0 0
    %1670 = vmatprep.subr.bf16.mxu0 0
    %1671 = vmatpush1.bf16.msra.mxu0 0
    %1672 = vmatprep.subr.bf16.mxu0 0
    %1673 = vmatpush1.bf16.msra.mxu0 0
    %1674 = vmatprep.subr.bf16.mxu0 0
    %1675 = vmatpush1.bf16.msra.mxu0 0
    %1676 = vmatprep.subr.bf16.mxu0 0
    %1677 = vmatpush1.bf16.msra.mxu0 0
    %1678 = vmatprep.subr.bf16.mxu0 0
    %1679 = vmatpush1.bf16.msra.mxu0 0
    %1680 = vmatprep.subr.bf16.mxu0 0
    %1681 = vmatpush1.bf16.msra.mxu0 0
    %1682 = vmatprep.subr.bf16.mxu0 0
    %1683 = vmatpush1.bf16.msra.mxu0 0
    %1684 = vmatprep.mubr.bf16.mxu0 0
    %1685 = vmatmul.mubr.bf16.gmra.mrb[0].mxu0 %v1650
    %v1686 = vpop.f32.mrb[0].mxu0
    %v1687 = vadd.f32 0.0, %v1686
    %v1688 = vpop.f32.mrb[0].mxu0
    %v1689 = vpop.f32.mrb[0].mxu0
    %v1690 = vpop.f32.mrb[0].mxu0
    %1691 = vdwg.mxu0
    %v1692 = vrot.slane %v1614, 7
    %v1693 = vsel %vm1326, %v1692, %v1613
    %v1694 = vrot.slane %v1615, 6
    %v1695 = vsel %vm1328, %v1694, %v1693
    %v1696 = vrot.slane %v1616, 5
    %v1697 = vsel %vm1330, %v1696, %v1695
    %v1698 = vrot.slane %v1617, 4
    %v1699 = vsel %vm1332, %v1698, %v1697
    %v1700 = vrot.slane %v1618, 3
    %v1701 = vsel %vm1334, %v1700, %v1699
    %v1702 = vrot.slane %v1619, 2
    %v1703 = vsel %vm1336, %v1702, %v1701
    %v1704 = vrot.slane %v1620, 1
    %v1705 = vsel %vm1338, %v1704, %v1703
    %v1706 = vpack.c.b16 %v1705, %v1705
    %v1711 = vunpack.c.l.b16 %v1596
    %v1712 = vunpack.c.l.b16 %v1597
    %v1713 = vunpack.c.l.b16 %v1598
    %v1714 = vunpack.c.l.b16 %v1599
    %v1715 = vpack.c.b16 %v1712, %v1711
    %v1716 = vpack.c.b16 %v1714, %v1713
    %v1720 = vsel %vm1648, %v1706, 0
    %1722 = vmatprep.subr.bf16.mxu0 0
    %1723 = vmatpush1.bf16.msra.mxu0 %v1715
    %1724 = vmatprep.subr.bf16.mxu0 0
    %1725 = vmatpush1.bf16.msra.mxu0 %v1716
    %1726 = vmatprep.subr.bf16.mxu0 0
    %1727 = vmatpush1.bf16.msra.mxu0 0
    %1728 = vmatprep.subr.bf16.mxu0 0
    %1729 = vmatpush1.bf16.msra.mxu0 0
    %1730 = vmatprep.subr.bf16.mxu0 0
    %1731 = vmatpush1.bf16.msra.mxu0 0
    %1732 = vmatprep.subr.bf16.mxu0 0
    %1733 = vmatpush1.bf16.msra.mxu0 0
    %1734 = vmatprep.subr.bf16.mxu0 0
    %1735 = vmatpush1.bf16.msra.mxu0 0
    %1736 = vmatprep.subr.bf16.mxu0 0
    %1737 = vmatpush1.bf16.msra.mxu0 0
    %1738 = vmatprep.subr.bf16.mxu0 0
    %1739 = vmatpush1.bf16.msra.mxu0 0
    %1740 = vmatprep.subr.bf16.mxu0 0
    %1741 = vmatpush1.bf16.msra.mxu0 0
    %1742 = vmatprep.subr.bf16.mxu0 0
    %1743 = vmatpush1.bf16.msra.mxu0 0
    %1744 = vmatprep.subr.bf16.mxu0 0
    %1745 = vmatpush1.bf16.msra.mxu0 0
    %1746 = vmatprep.subr.bf16.mxu0 0
    %1747 = vmatpush1.bf16.msra.mxu0 0
    %1748 = vmatprep.subr.bf16.mxu0 0
    %1749 = vmatpush1.bf16.msra.mxu0 0
    %1750 = vmatprep.subr.bf16.mxu0 0
    %1751 = vmatpush1.bf16.msra.mxu0 0
    %1752 = vmatprep.subr.bf16.mxu0 0
    %1753 = vmatpush1.bf16.msra.mxu0 0
    %1754 = vmatprep.mubr.bf16.mxu0 0
    %1755 = vmatmul.mubr.bf16.gmra.mrb[0].mxu0 %v1720
    %v1756 = vpop.f32.mrb[0].mxu0
    %v1757 = vadd.f32 %v1687, %v1756
    %v1758 = vpop.f32.mrb[0].mxu0
    %v1759 = vpop.f32.mrb[0].mxu0
    %v1760 = vpop.f32.mrb[0].mxu0
    %1761 = vdwg.mxu0
    %s1762 = scalar_lea.vmem [#allocation2], 32
    %v1763 = vld [vmem:[%s1762] sm:$0xf]
    %v1764 = vld [vmem:[%s1762 + $0x4] sm:$0xf]
    %v1765 = vld [vmem:[%s1762 + $0x8] sm:$0xf]
    %v1766 = vld [vmem:[%s1762 + $0xc] sm:$0xf]
    %v1767 = vrot.slane %v1613, 2
    %v1768 = vrot.slane %v1614, 1
    %v1769 = vsel %vm1326, %v1768, %v1767
    %v1770 = vsel %vm1328, %v1615, %v1769
    %v1771 = vrot.slane %v1616, 7
    %v1772 = vsel %vm1330, %v1771, %v1770
    %v1773 = vrot.slane %v1617, 6
    %v1774 = vsel %vm1332, %v1773, %v1772
    %v1775 = vrot.slane %v1618, 5
    %v1776 = vsel %vm1334, %v1775, %v1774
    %v1777 = vrot.slane %v1619, 4
    %v1778 = vsel %vm1336, %v1777, %v1776
    %v1779 = vrot.slane %v1620, 3
    %v1780 = vsel %vm1338, %v1779, %v1778
    %v1781 = vpack.c.b16 %v1780, %v1780
    %v1786 = vunpack.c.l.b16 %v1763
    %v1787 = vunpack.c.l.b16 %v1764
    %v1788 = vunpack.c.l.b16 %v1765
    %v1789 = vunpack.c.l.b16 %v1766
    %v1790 = vpack.c.b16 %v1787, %v1786
    %v1791 = vpack.c.b16 %v1789, %v1788
    %v1795 = vsel %vm1648, %v1781, 0
    %1797 = vmatprep.subr.bf16.mxu0 0
    %1798 = vmatpush1.bf16.msra.mxu0 %v1790
    %1799 = vmatprep.subr.bf16.mxu0 0
    %1800 = vmatpush1.bf16.msra.mxu0 %v1791
    %1801 = vmatprep.subr.bf16.mxu0 0
    %1802 = vmatpush1.bf16.msra.mxu0 0
    %1803 = vmatprep.subr.bf16.mxu0 0
    %1804 = vmatpush1.bf16.msra.mxu0 0
    %1805 = vmatprep.subr.bf16.mxu0 0
    %1806 = vmatpush1.bf16.msra.mxu0 0
    %1807 = vmatprep.subr.bf16.mxu0 0
    %1808 = vmatpush1.bf16.msra.mxu0 0
    %1809 = vmatprep.subr.bf16.mxu0 0
    %1810 = vmatpush1.bf16.msra.mxu0 0
    %1811 = vmatprep.subr.bf16.mxu0 0
    %1812 = vmatpush1.bf16.msra.mxu0 0
    %1813 = vmatprep.subr.bf16.mxu0 0
    %1814 = vmatpush1.bf16.msra.mxu0 0
    %1815 = vmatprep.subr.bf16.mxu0 0
    %1816 = vmatpush1.bf16.msra.mxu0 0
    %1817 = vmatprep.subr.bf16.mxu0 0
    %1818 = vmatpush1.bf16.msra.mxu0 0
    %1819 = vmatprep.subr.bf16.mxu0 0
    %1820 = vmatpush1.bf16.msra.mxu0 0
    %1821 = vmatprep.subr.bf16.mxu0 0
    %1822 = vmatpush1.bf16.msra.mxu0 0
    %1823 = vmatprep.subr.bf16.mxu0 0
    %1824 = vmatpush1.bf16.msra.mxu0 0
    %1825 = vmatprep.subr.bf16.mxu0 0
    %1826 = vmatpush1.bf16.msra.mxu0 0
    %1827 = vmatprep.subr.bf16.mxu0 0
    %1828 = vmatpush1.bf16.msra.mxu0 0
    %1829 = vmatprep.mubr.bf16.mxu0 0
    %1830 = vmatmul.mubr.bf16.gmra.mrb[0].mxu0 %v1795
    %v1831 = vpop.f32.mrb[0].mxu0
    %v1832 = vadd.f32 0.0, %v1831
    %v1833 = vpop.f32.mrb[0].mxu0
    %v1834 = vpop.f32.mrb[0].mxu0
    %v1835 = vpop.f32.mrb[0].mxu0
    %1836 = vdwg.mxu0
    %v1837 = vadd.f32 %v1757, %v1832
    %s1838 = scalar_lea.vmem [#allocation2], 48
    %v1839 = vld [vmem:[%s1838] sm:$0xf]
    %v1840 = vld [vmem:[%s1838 + $0x4] sm:$0xf]
    %v1841 = vld [vmem:[%s1838 + $0x8] sm:$0xf]
    %v1842 = vld [vmem:[%s1838 + $0xc] sm:$0xf]
    %v1843 = vrot.slane %v1613, 3
    %v1844 = vrot.slane %v1614, 2
    %v1845 = vsel %vm1326, %v1844, %v1843
    %v1846 = vrot.slane %v1615, 1
    %v1847 = vsel %vm1328, %v1846, %v1845
    %v1848 = vsel %vm1330, %v1616, %v1847
    %v1849 = vrot.slane %v1617, 7
    %v1850 = vsel %vm1332, %v1849, %v1848
    %v1851 = vrot.slane %v1618, 6
    %v1852 = vsel %vm1334, %v1851, %v1850
    %v1853 = vrot.slane %v1619, 5
    %v1854 = vsel %vm1336, %v1853, %v1852
    %v1855 = vrot.slane %v1620, 4
    %v1856 = vsel %vm1338, %v1855, %v1854
    %v1857 = vpack.c.b16 %v1856, %v1856
    %v1862 = vunpack.c.l.b16 %v1839
    %v1863 = vunpack.c.l.b16 %v1840
    %v1864 = vunpack.c.l.b16 %v1841
    %v1865 = vunpack.c.l.b16 %v1842
    %v1866 = vpack.c.b16 %v1863, %v1862
    %v1867 = vpack.c.b16 %v1865, %v1864
    %v1871 = vsel %vm1648, %v1857, 0
    %1873 = vmatprep.subr.bf16.mxu0 0
    %1874 = vmatpush1.bf16.msra.mxu0 %v1866
    %1875 = vmatprep.subr.bf16.mxu0 0
    %1876 = vmatpush1.bf16.msra.mxu0 %v1867
    %1877 = vmatprep.subr.bf16.mxu0 0
    %1878 = vmatpush1.bf16.msra.mxu0 0
    %1879 = vmatprep.subr.bf16.mxu0 0
    %1880 = vmatpush1.bf16.msra.mxu0 0
    %1881 = vmatprep.subr.bf16.mxu0 0
    %1882 = vmatpush1.bf16.msra.mxu0 0
    %1883 = vmatprep.subr.bf16.mxu0 0
    %1884 = vmatpush1.bf16.msra.mxu0 0
    %1885 = vmatprep.subr.bf16.mxu0 0
    %1886 = vmatpush1.bf16.msra.mxu0 0
    %1887 = vmatprep.subr.bf16.mxu0 0
    %1888 = vmatpush1.bf16.msra.mxu0 0
    %1889 = vmatprep.subr.bf16.mxu0 0
    %1890 = vmatpush1.bf16.msra.mxu0 0
    %1891 = vmatprep.subr.bf16.mxu0 0
    %1892 = vmatpush1.bf16.msra.mxu0 0
    %1893 = vmatprep.subr.bf16.mxu0 0
    %1894 = vmatpush1.bf16.msra.mxu0 0
    %1895 = vmatprep.subr.bf16.mxu0 0
    %1896 = vmatpush1.bf16.msra.mxu0 0
    %1897 = vmatprep.subr.bf16.mxu0 0
    %1898 = vmatpush1.bf16.msra.mxu0 0
    %1899 = vmatprep.subr.bf16.mxu0 0
    %1900 = vmatpush1.bf16.msra.mxu0 0
    %1901 = vmatprep.subr.bf16.mxu0 0
    %1902 = vmatpush1.bf16.msra.mxu0 0
    %1903 = vmatprep.subr.bf16.mxu0 0
    %1904 = vmatpush1.bf16.msra.mxu0 0
    %1905 = vmatprep.mubr.bf16.mxu0 0
    %1906 = vmatmul.mubr.bf16.gmra.mrb[0].mxu0 %v1871
    %v1907 = vpop.f32.mrb[0].mxu0
    %v1908 = vadd.f32 0.0, %v1907
    %v1909 = vpop.f32.mrb[0].mxu0
    %v1910 = vpop.f32.mrb[0].mxu0
    %v1911 = vpop.f32.mrb[0].mxu0
    %1912 = vdwg.mxu0
    %v1913 = vadd.f32 %v1837, %v1908
    %s1914 = scalar_lea.vmem [#allocation2], 64
    %v1915 = vld [vmem:[%s1914] sm:$0xf]
    %v1916 = vld [vmem:[%s1914 + $0x4] sm:$0xf]
    %v1917 = vld [vmem:[%s1914 + $0x8] sm:$0xf]
    %v1918 = vld [vmem:[%s1914 + $0xc] sm:$0xf]
    %v1919 = vrot.slane %v1613, 4
    %v1920 = vrot.slane %v1614, 3
    %v1921 = vsel %vm1326, %v1920, %v1919
    %v1922 = vrot.slane %v1615, 2
    %v1923 = vsel %vm1328, %v1922, %v1921
    %v1924 = vrot.slane %v1616, 1
    %v1925 = vsel %vm1330, %v1924, %v1923
    %v1926 = vsel %vm1332, %v1617, %v1925
    %v1927 = vrot.slane %v1618, 7
    %v1928 = vsel %vm1334, %v1927, %v1926
    %v1929 = vrot.slane %v1619, 6
    %v1930 = vsel %vm1336, %v1929, %v1928
    %v1931 = vrot.slane %v1620, 5
    %v1932 = vsel %vm1338, %v1931, %v1930
    %v1933 = vpack.c.b16 %v1932, %v1932
    %v1938 = vunpack.c.l.b16 %v1915
    %v1939 = vunpack.c.l.b16 %v1916
    %v1940 = vunpack.c.l.b16 %v1917
    %v1941 = vunpack.c.l.b16 %v1918
    %v1942 = vpack.c.b16 %v1939, %v1938
    %v1943 = vpack.c.b16 %v1941, %v1940
    %v1947 = vsel %vm1648, %v1933, 0
    %1949 = vmatprep.subr.bf16.mxu0 0
    %1950 = vmatpush1.bf16.msra.mxu0 %v1942
    %1951 = vmatprep.subr.bf16.mxu0 0
    %1952 = vmatpush1.bf16.msra.mxu0 %v1943
    %1953 = vmatprep.subr.bf16.mxu0 0
    %1954 = vmatpush1.bf16.msra.mxu0 0
    %1955 = vmatprep.subr.bf16.mxu0 0
    %1956 = vmatpush1.bf16.msra.mxu0 0
    %1957 = vmatprep.subr.bf16.mxu0 0
    %1958 = vmatpush1.bf16.msra.mxu0 0
    %1959 = vmatprep.subr.bf16.mxu0 0
    %1960 = vmatpush1.bf16.msra.mxu0 0
    %1961 = vmatprep.subr.bf16.mxu0 0
    %1962 = vmatpush1.bf16.msra.mxu0 0
    %1963 = vmatprep.subr.bf16.mxu0 0
    %1964 = vmatpush1.bf16.msra.mxu0 0
    %1965 = vmatprep.subr.bf16.mxu0 0
    %1966 = vmatpush1.bf16.msra.mxu0 0
    %1967 = vmatprep.subr.bf16.mxu0 0
    %1968 = vmatpush1.bf16.msra.mxu0 0
    %1969 = vmatprep.subr.bf16.mxu0 0
    %1970 = vmatpush1.bf16.msra.mxu0 0
    %1971 = vmatprep.subr.bf16.mxu0 0
    %1972 = vmatpush1.bf16.msra.mxu0 0
    %1973 = vmatprep.subr.bf16.mxu0 0
    %1974 = vmatpush1.bf16.msra.mxu0 0
    %1975 = vmatprep.subr.bf16.mxu0 0
    %1976 = vmatpush1.bf16.msra.mxu0 0
    %1977 = vmatprep.subr.bf16.mxu0 0
    %1978 = vmatpush1.bf16.msra.mxu0 0
    %1979 = vmatprep.subr.bf16.mxu0 0
    %1980 = vmatpush1.bf16.msra.mxu0 0
    %1981 = vmatprep.mubr.bf16.mxu0 0
    %1982 = vmatmul.mubr.bf16.gmra.mrb[0].mxu0 %v1947
    %v1983 = vpop.f32.mrb[0].mxu0
    %v1984 = vadd.f32 0.0, %v1983
    %v1985 = vpop.f32.mrb[0].mxu0
    %v1986 = vpop.f32.mrb[0].mxu0
    %v1987 = vpop.f32.mrb[0].mxu0
    %1988 = vdwg.mxu0
    %v1989 = vadd.f32 %v1913, %v1984
    %s1990 = scalar_lea.vmem [#allocation2], 80
    %v1991 = vld [vmem:[%s1990] sm:$0xf]
    %v1992 = vld [vmem:[%s1990 + $0x4] sm:$0xf]
    %v1993 = vld [vmem:[%s1990 + $0x8] sm:$0xf]
    %v1994 = vld [vmem:[%s1990 + $0xc] sm:$0xf]
    %v1995 = vrot.slane %v1613, 5
    %v1996 = vrot.slane %v1614, 4
    %v1997 = vsel %vm1326, %v1996, %v1995
    %v1998 = vrot.slane %v1615, 3
    %v1999 = vsel %vm1328, %v1998, %v1997
    %v2000 = vrot.slane %v1616, 2
    %v2001 = vsel %vm1330, %v2000, %v1999
    %v2002 = vrot.slane %v1617, 1
    %v2003 = vsel %vm1332, %v2002, %v2001
    %v2004 = vsel %vm1334, %v1618, %v2003
    %v2005 = vrot.slane %v1619, 7
    %v2006 = vsel %vm1336, %v2005, %v2004
    %v2007 = vrot.slane %v1620, 6
    %v2008 = vsel %vm1338, %v2007, %v2006
    %v2009 = vpack.c.b16 %v2008, %v2008
    %v2014 = vunpack.c.l.b16 %v1991
    %v2015 = vunpack.c.l.b16 %v1992
    %v2016 = vunpack.c.l.b16 %v1993
    %v2017 = vunpack.c.l.b16 %v1994
    %v2018 = vpack.c.b16 %v2015, %v2014
    %v2019 = vpack.c.b16 %v2017, %v2016
    %v2023 = vsel %vm1648, %v2009, 0
    %2025 = vmatprep.subr.bf16.mxu0 0
    %2026 = vmatpush1.bf16.msra.mxu0 %v2018
    %2027 = vmatprep.subr.bf16.mxu0 0
    %2028 = vmatpush1.bf16.msra.mxu0 %v2019
    %2029 = vmatprep.subr.bf16.mxu0 0
    %2030 = vmatpush1.bf16.msra.mxu0 0
    %2031 = vmatprep.subr.bf16.mxu0 0
    %2032 = vmatpush1.bf16.msra.mxu0 0
    %2033 = vmatprep.subr.bf16.mxu0 0
    %2034 = vmatpush1.bf16.msra.mxu0 0
    %2035 = vmatprep.subr.bf16.mxu0 0
    %2036 = vmatpush1.bf16.msra.mxu0 0
    %2037 = vmatprep.subr.bf16.mxu0 0
    %2038 = vmatpush1.bf16.msra.mxu0 0
    %2039 = vmatprep.subr.bf16.mxu0 0
    %2040 = vmatpush1.bf16.msra.mxu0 0
    %2041 = vmatprep.subr.bf16.mxu0 0
    %2042 = vmatpush1.bf16.msra.mxu0 0
    %2043 = vmatprep.subr.bf16.mxu0 0
    %2044 = vmatpush1.bf16.msra.mxu0 0
    %2045 = vmatprep.subr.bf16.mxu0 0
    %2046 = vmatpush1.bf16.msra.mxu0 0
    %2047 = vmatprep.subr.bf16.mxu0 0
    %2048 = vmatpush1.bf16.msra.mxu0 0
    %2049 = vmatprep.subr.bf16.mxu0 0
    %2050 = vmatpush1.bf16.msra.mxu0 0
    %2051 = vmatprep.subr.bf16.mxu0 0
    %2052 = vmatpush1.bf16.msra.mxu0 0
    %2053 = vmatprep.subr.bf16.mxu0 0
    %2054 = vmatpush1.bf16.msra.mxu0 0
    %2055 = vmatprep.subr.bf16.mxu0 0
    %2056 = vmatpush1.bf16.msra.mxu0 0
    %2057 = vmatprep.mubr.bf16.mxu0 0
    %2058 = vmatmul.mubr.bf16.gmra.mrb[0].mxu0 %v2023
    %v2059 = vpop.f32.mrb[0].mxu0
    %v2060 = vadd.f32 0.0, %v2059
    %v2061 = vpop.f32.mrb[0].mxu0
    %v2062 = vpop.f32.mrb[0].mxu0
    %v2063 = vpop.f32.mrb[0].mxu0
    %2064 = vdwg.mxu0
    %v2065 = vadd.f32 %v1989, %v2060
    %s2066 = scalar_lea.vmem [#allocation2], 96
    %v2067 = vld [vmem:[%s2066] sm:$0xf]
    %v2068 = vld [vmem:[%s2066 + $0x4] sm:$0xf]
    %v2069 = vld [vmem:[%s2066 + $0x8] sm:$0xf]
    %v2070 = vld [vmem:[%s2066 + $0xc] sm:$0xf]
    %v2071 = vrot.slane %v1613, 6
    %v2072 = vrot.slane %v1614, 5
    %v2073 = vsel %vm1326, %v2072, %v2071
    %v2074 = vrot.slane %v1615, 4
    %v2075 = vsel %vm1328, %v2074, %v2073
    %v2076 = vrot.slane %v1616, 3
    %v2077 = vsel %vm1330, %v2076, %v2075
    %v2078 = vrot.slane %v1617, 2
    %v2079 = vsel %vm1332, %v2078, %v2077
    %v2080 = vrot.slane %v1618, 1
    %v2081 = vsel %vm1334, %v2080, %v2079
    %v2082 = vsel %vm1336, %v1619, %v2081
    %v2083 = vrot.slane %v1620, 7
    %v2084 = vsel %vm1338, %v2083, %v2082
    %v2085 = vpack.c.b16 %v2084, %v2084
    %v2090 = vunpack.c.l.b16 %v2067
    %v2091 = vunpack.c.l.b16 %v2068
    %v2092 = vunpack.c.l.b16 %v2069
    %v2093 = vunpack.c.l.b16 %v2070
    %v2094 = vpack.c.b16 %v2091, %v2090
    %v2095 = vpack.c.b16 %v2093, %v2092
    %v2099 = vsel %vm1648, %v2085, 0
    %2101 = vmatprep.subr.bf16.mxu0 0
    %2102 = vmatpush1.bf16.msra.mxu0 %v2094
    %2103 = vmatprep.subr.bf16.mxu0 0
    %2104 = vmatpush1.bf16.msra.mxu0 %v2095
    %2105 = vmatprep.subr.bf16.mxu0 0
    %2106 = vmatpush1.bf16.msra.mxu0 0
    %2107 = vmatprep.subr.bf16.mxu0 0
    %2108 = vmatpush1.bf16.msra.mxu0 0
    %2109 = vmatprep.subr.bf16.mxu0 0
    %2110 = vmatpush1.bf16.msra.mxu0 0
    %2111 = vmatprep.subr.bf16.mxu0 0
    %2112 = vmatpush1.bf16.msra.mxu0 0
    %2113 = vmatprep.subr.bf16.mxu0 0
    %2114 = vmatpush1.bf16.msra.mxu0 0
    %2115 = vmatprep.subr.bf16.mxu0 0
    %2116 = vmatpush1.bf16.msra.mxu0 0
    %2117 = vmatprep.subr.bf16.mxu0 0
    %2118 = vmatpush1.bf16.msra.mxu0 0
    %2119 = vmatprep.subr.bf16.mxu0 0
    %2120 = vmatpush1.bf16.msra.mxu0 0
    %2121 = vmatprep.subr.bf16.mxu0 0
    %2122 = vmatpush1.bf16.msra.mxu0 0
    %2123 = vmatprep.subr.bf16.mxu0 0
    %2124 = vmatpush1.bf16.msra.mxu0 0
    %2125 = vmatprep.subr.bf16.mxu0 0
    %2126 = vmatpush1.bf16.msra.mxu0 0
    %2127 = vmatprep.subr.bf16.mxu0 0
    %2128 = vmatpush1.bf16.msra.mxu0 0
    %2129 = vmatprep.subr.bf16.mxu0 0
    %2130 = vmatpush1.bf16.msra.mxu0 0
    %2131 = vmatprep.subr.bf16.mxu0 0
    %2132 = vmatpush1.bf16.msra.mxu0 0
    %2133 = vmatprep.mubr.bf16.mxu0 0
    %2134 = vmatmul.mubr.bf16.gmra.mrb[0].mxu0 %v2099
    %v2135 = vpop.f32.mrb[0].mxu0
    %v2136 = vadd.f32 0.0, %v2135
    %v2137 = vpop.f32.mrb[0].mxu0
    %v2138 = vpop.f32.mrb[0].mxu0
    %v2139 = vpop.f32.mrb[0].mxu0
    %2140 = vdwg.mxu0
    %v2141 = vadd.f32 %v2065, %v2136
    %s2142 = scalar_lea.vmem [#allocation2], 112
    %v2143 = vld [vmem:[%s2142] sm:$0xf]
    %v2144 = vld [vmem:[%s2142 + $0x4] sm:$0xf]
    %v2145 = vld [vmem:[%s2142 + $0x8] sm:$0xf]
    %v2146 = vld [vmem:[%s2142 + $0xc] sm:$0xf]
    %v2147 = vrot.slane %v1613, 7
    %v2148 = vrot.slane %v1614, 6
    %v2149 = vsel %vm1326, %v2148, %v2147
    %v2150 = vrot.slane %v1615, 5
    %v2151 = vsel %vm1328, %v2150, %v2149
    %v2152 = vrot.slane %v1616, 4
    %v2153 = vsel %vm1330, %v2152, %v2151
    %v2154 = vrot.slane %v1617, 3
    %v2155 = vsel %vm1332, %v2154, %v2153
    %v2156 = vrot.slane %v1618, 2
    %v2157 = vsel %vm1334, %v2156, %v2155
    %v2158 = vrot.slane %v1619, 1
    %v2159 = vsel %vm1336, %v2158, %v2157
    %v2160 = vsel %vm1338, %v1620, %v2159
    %v2161 = vpack.c.b16 %v2160, %v2160
    %v2166 = vunpack.c.l.b16 %v2143
    %v2167 = vunpack.c.l.b16 %v2144
    %v2168 = vunpack.c.l.b16 %v2145
    %v2169 = vunpack.c.l.b16 %v2146
    %v2170 = vpack.c.b16 %v2167, %v2166
    %v2171 = vpack.c.b16 %v2169, %v2168
    %v2175 = vsel %vm1648, %v2161, 0
    %2177 = vmatprep.subr.bf16.mxu0 0
    %2178 = vmatpush1.bf16.msra.mxu0 %v2170
    %2179 = vmatprep.subr.bf16.mxu0 0
    %2180 = vmatpush1.bf16.msra.mxu0 %v2171
    %2181 = vmatprep.subr.bf16.mxu0 0
    %2182 = vmatpush1.bf16.msra.mxu0 0
    %2183 = vmatprep.subr.bf16.mxu0 0
    %2184 = vmatpush1.bf16.msra.mxu0 0
    %2185 = vmatprep.subr.bf16.mxu0 0
    %2186 = vmatpush1.bf16.msra.mxu0 0
    %2187 = vmatprep.subr.bf16.mxu0 0
    %2188 = vmatpush1.bf16.msra.mxu0 0
    %2189 = vmatprep.subr.bf16.mxu0 0
    %2190 = vmatpush1.bf16.msra.mxu0 0
    %2191 = vmatprep.subr.bf16.mxu0 0
    %2192 = vmatpush1.bf16.msra.mxu0 0
    %2193 = vmatprep.subr.bf16.mxu0 0
    %2194 = vmatpush1.bf16.msra.mxu0 0
    %2195 = vmatprep.subr.bf16.mxu0 0
    %2196 = vmatpush1.bf16.msra.mxu0 0
    %2197 = vmatprep.subr.bf16.mxu0 0
    %2198 = vmatpush1.bf16.msra.mxu0 0
    %2199 = vmatprep.subr.bf16.mxu0 0
    %2200 = vmatpush1.bf16.msra.mxu0 0
    %2201 = vmatprep.subr.bf16.mxu0 0
    %2202 = vmatpush1.bf16.msra.mxu0 0
    %2203 = vmatprep.subr.bf16.mxu0 0
    %2204 = vmatpush1.bf16.msra.mxu0 0
    %2205 = vmatprep.subr.bf16.mxu0 0
    %2206 = vmatpush1.bf16.msra.mxu0 0
    %2207 = vmatprep.subr.bf16.mxu0 0
    %2208 = vmatpush1.bf16.msra.mxu0 0
    %2209 = vmatprep.mubr.bf16.mxu0 0
    %2210 = vmatmul.mubr.bf16.gmra.mrb[0].mxu0 %v2175
    %v2211 = vpop.f32.mrb[0].mxu0
    %v2212 = vadd.f32 0.0, %v2211
    %v2213 = vpop.f32.mrb[0].mxu0
    %v2214 = vpop.f32.mrb[0].mxu0
    %v2215 = vpop.f32.mrb[0].mxu0
    %2216 = vdwg.mxu0
    %v2217 = vadd.f32 %v2141, %v2212
    %v2218 = vld [vmem:[%s8] sm:$0x1]
    %v2220 = vlaneseq
    %v2221 = vshrl.u32 %v2220, 7
    %v2222 = vsub.s32 0, %v2221
    %v2223 = vrot.slane %v2218, %v2222
    %v2225 = vadd.f32 %v2217, %v2223
    %v2226 = vmax.f32 %v2225, 0.0
    %v2227 = vpack.c.bf16 %v2226, %v2226
    %v2228 = vld [vmem:[%s9] sm:$0xf]
    %v2229 = vld [vmem:[%s9 + $0x4] sm:$0xf]
    %v2230 = vld [vmem:[%s9 + $0x8] sm:$0xf]
    %v2231 = vld [vmem:[%s9 + $0xc] sm:$0xf]
    %v2232 = vld [vmem:[%s9 + $0x10] sm:$0xf]
    %v2233 = vld [vmem:[%s9 + $0x14] sm:$0xf]
    %v2234 = vld [vmem:[%s9 + $0x18] sm:$0xf]
    %v2235 = vld [vmem:[%s9 + $0x1c] sm:$0xf]
    %v2236 = vld [vmem:[%s9 + $0x20] sm:$0xf]
    %v2237 = vld [vmem:[%s9 + $0x24] sm:$0xf]
    %v2238 = vld [vmem:[%s9 + $0x28] sm:$0xf]
    %v2239 = vld [vmem:[%s9 + $0x2c] sm:$0xf]
    %v2240 = vld [vmem:[%s9 + $0x30] sm:$0xf]
    %v2241 = vld [vmem:[%s9 + $0x34] sm:$0xf]
    %v2242 = vld [vmem:[%s9 + $0x38] sm:$0xf]
    %v2243 = vld [vmem:[%s9 + $0x3c] sm:$0xf]
    %v2244 = vld [vmem:[%s10] sm:$0x1]
    %v2246 = vlaneseq
    %v2247 = vshrl.u32 %v2246, 7
    %v2248 = vsub.s32 0, %v2247
    %v2249 = vrot.slane %v2244, %v2248
    %v2267 = vunpack.c.l.b16 %v2228
    %v2268 = vunpack.c.l.b16 %v2229
    %v2269 = vunpack.c.l.b16 %v2230
    %v2270 = vunpack.c.l.b16 %v2231
    %v2271 = vunpack.c.l.b16 %v2232
    %v2272 = vunpack.c.l.b16 %v2233
    %v2273 = vunpack.c.l.b16 %v2234
    %v2274 = vunpack.c.l.b16 %v2235
    %v2275 = vunpack.c.l.b16 %v2236
    %v2276 = vunpack.c.l.b16 %v2237
    %v2277 = vunpack.c.l.b16 %v2238
    %v2278 = vunpack.c.l.b16 %v2239
    %v2279 = vunpack.c.l.b16 %v2240
    %v2280 = vunpack.c.l.b16 %v2241
    %v2281 = vunpack.c.l.b16 %v2242
    %v2282 = vunpack.c.l.b16 %v2243
    %v2283 = vpack.c.b16 %v2268, %v2267
    %v2284 = vpack.c.b16 %v2270, %v2269
    %v2285 = vpack.c.b16 %v2272, %v2271
    %v2286 = vpack.c.b16 %v2274, %v2273
    %v2287 = vpack.c.b16 %v2276, %v2275
    %v2288 = vpack.c.b16 %v2278, %v2277
    %v2289 = vpack.c.b16 %v2280, %v2279
    %v2290 = vpack.c.b16 %v2282, %v2281
    %2299 = vmatprep.subr.bf16.mxu0 0
    %2300 = vmatpush1.bf16.msra.mxu0 %v2283
    %2301 = vmatprep.subr.bf16.mxu0 0
    %2302 = vmatpush1.bf16.msra.mxu0 %v2284
    %2303 = vmatprep.subr.bf16.mxu0 0
    %2304 = vmatpush1.bf16.msra.mxu0 %v2285
    %2305 = vmatprep.subr.bf16.mxu0 0
    %2306 = vmatpush1.bf16.msra.mxu0 %v2286
    %2307 = vmatprep.subr.bf16.mxu0 0
    %2308 = vmatpush1.bf16.msra.mxu0 %v2287
    %2309 = vmatprep.subr.bf16.mxu0 0
    %2310 = vmatpush1.bf16.msra.mxu0 %v2288
    %2311 = vmatprep.subr.bf16.mxu0 0
    %2312 = vmatpush1.bf16.msra.mxu0 %v2289
    %2313 = vmatprep.subr.bf16.mxu0 0
    %2314 = vmatpush1.bf16.msra.mxu0 %v2290
    %2315 = vmatprep.subr.bf16.mxu0 0
    %2316 = vmatpush1.bf16.msra.mxu0 0
    %2317 = vmatprep.subr.bf16.mxu0 0
    %2318 = vmatpush1.bf16.msra.mxu0 0
    %2319 = vmatprep.subr.bf16.mxu0 0
    %2320 = vmatpush1.bf16.msra.mxu0 0
    %2321 = vmatprep.subr.bf16.mxu0 0
    %2322 = vmatpush1.bf16.msra.mxu0 0
    %2323 = vmatprep.subr.bf16.mxu0 0
    %2324 = vmatpush1.bf16.msra.mxu0 0
    %2325 = vmatprep.subr.bf16.mxu0 0
    %2326 = vmatpush1.bf16.msra.mxu0 0
    %2327 = vmatprep.subr.bf16.mxu0 0
    %2328 = vmatpush1.bf16.msra.mxu0 0
    %2329 = vmatprep.subr.bf16.mxu0 0
    %2330 = vmatpush1.bf16.msra.mxu0 0
    %2331 = vmatprep.mubr.bf16.mxu0 0
    %2332 = vmatmul.mubr.bf16.gmra.mrb[0].mxu0 %v2227
    %v2333 = vpop.f32.mrb[0].mxu0
    %v2334 = vadd.f32 %v2249, %v2333
    %v2335 = vpop.f32.mrb[0].mxu0
    %v2336 = vpop.f32.mrb[0].mxu0
    %v2337 = vpop.f32.mrb[0].mxu0
    %2338 = vdwg.mxu0
    %2339 = vst [vmem:[#allocation5] sm:$0xff] %v2334
    // Predicated region
    $region50: #{tpu_custom_call.1} parent=1 // pred_check
      _
    $region51: #{tpu_custom_call.1} parent=1 // pred_check_branch
      %2341 = sbr.rel (0) target = $region53
    $region52: #{tpu_custom_call.1} parent=1 // pred_region
      %s2343 = ssub.s32 128, 128
      %2344 = vsyncadd [#allocation4], %s2343
      %s2346 = sshll.u32 [#allocation5], 4
      %s2347 = int_to_ptr.vmem [resolvable:$true] %s2346
      %2349 = dma.vmem_to_hbm [thread:$0]  %s2347, 128, %s11, [#allocation4]
    $region53: #{tpu_custom_call.1} parent=1 // pred_fallthru
      _
    // Predicated region
    $region54: #{tpu_custom_call.1} parent=1 // pred_check
      _
    $region55: #{tpu_custom_call.1} parent=1 // pred_check_branch
      %2351 = sbr.rel (0) target = $region57
    $region56: #{tpu_custom_call.1} parent=1 // pred_region
      %2352 = dma.done [#allocation4], 128
    $region57: #{tpu_custom_call.1} parent=1 // pred_fallthru
      _
    %2353 = vsyncpa [#allocation3], 1
    %2354 = vsyncpa [#allocation4], 1

</llo_original>
